<compile_context>
chip_gen: v5e
topology: v5e:2x2
jax: 0.10.0
libtpu: 0.0.40
codegen_flags: <defaults>
</compile_context>

<pallas_src>
import jax
import jax.numpy as jnp
import numpy as np
from jax.experimental import pallas as pl
from jax.experimental.pallas import tpu as pltpu

# module hyper-parameters (from the PyTorch source)
N_EMBD = 32
N_HEAD = 4
HEAD_SIZE = N_EMBD // N_HEAD          # 8  (Block uses n_embd // n_head, not the global head_size=16)
BLOCK_SIZE = 32                       # max sequence length (causal mask size)
LN_EPS = 1e-5
NEG_BIG = -1e30                       # large finite negative (safer than -inf for masked rows)
# TODO(synk): dropout (p=0.2) is omitted — identity in eval mode; training-mode RNG dropout not implemented.


def _block_kernel(x_ref,                    # (Bb, T, C) f32
                  wqkv_ref, bqkv_ref,       # (C, 3C) bf16 (LN1 affine + scale folded), (1, 3C) f32
                  wf_ref, bf_ref,           # (C, C)  bf16 (LN2 affine folded),          (1, C)  f32
                  o_ref):                   # (Bb, T, C) f32
    x = x_ref[...]
    Bb, T, C = x.shape
    xf = x.reshape(Bb * T, C)               # collapse leading dims (T % 8 == 0)

    # ---- LayerNorm 1 (affine folded into wqkv/bqkv in the wrapper) ----
    mu = jnp.mean(xf, axis=-1, keepdims=True)
    var = jnp.mean((xf - mu) ** 2, axis=-1, keepdims=True)
    xn1 = (xf - mu) * jax.lax.rsqrt(var + LN_EPS)

    # ---- Fused QKV projection: one (Bb*T, C) @ (C, 3C) matmul, bf16 operands, f32 accum ----
    qkv = jnp.dot(xn1.astype(jnp.bfloat16), wqkv_ref[...],
                  preferred_element_type=jnp.float32) + bqkv_ref[0]
    q = qkv[:, :C].reshape(Bb, T, C).astype(jnp.bfloat16)        # attention scale already folded in
    k = qkv[:, C:2 * C].reshape(Bb, T, C).astype(jnp.bfloat16)
    v = qkv[:, 2 * C:].reshape(Bb, T, C).astype(jnp.bfloat16)

    # ---- Multi-head causal self-attention (per-head via lane masks) ----
    # Constants hoisted out of the head loop (JAX does not CSE broadcast_in_dim).
    row = jax.lax.broadcasted_iota(jnp.int32, (1, T, T), 1)
    col = jax.lax.broadcasted_iota(jnp.int32, (1, T, T), 2)
    mask_add = jnp.where(row >= col, 0.0, NEG_BIG).astype(jnp.float32)   # (1, T, T) additive mask
    lane = jax.lax.broadcasted_iota(jnp.int32, (1, 1, C), 2)
    head_masks = [(lane >= h * HEAD_SIZE) & (lane < (h + 1) * HEAD_SIZE)
                  for h in range(N_HEAD)]

    # TODO(synk): block-diagonal single-matmul multi-head form (lane-dense softmax)
    # skipped — only pays off at T=32; this test uses T=8.
    sa = None
    for h in range(N_HEAD):                 # static Python loop, 4 iterations
        hm = head_masks[h]
        qh = jnp.where(hm, q, 0.0)          # zero other heads' channels -> per-head contraction
        vh = jnp.where(hm, v, 0.0)          # per-head V lands at its output lanes (replaces concat)
        s = jnp.einsum('btc,bsc->bts', qh, k, preferred_element_type=jnp.float32)
        s = s + mask_add
        s = s - jnp.max(s, axis=-1, keepdims=True)
        p = jnp.exp(s)
        p = p * pl.reciprocal(jnp.sum(p, axis=-1, keepdims=True), approx=True)
        pv = jnp.einsum('bts,bsc->btc', p.astype(jnp.bfloat16), vh,
                        preferred_element_type=jnp.float32)
        sa = pv if sa is None else sa + pv

    x1 = xf + sa.reshape(Bb * T, C)         # residual 1

    # ---- LayerNorm 2 (affine folded into wf/bf) ----
    mu2 = jnp.mean(x1, axis=-1, keepdims=True)
    var2 = jnp.mean((x1 - mu2) ** 2, axis=-1, keepdims=True)
    xn2 = (x1 - mu2) * jax.lax.rsqrt(var2 + LN_EPS)

    # ---- FeedForward: Linear -> ReLU ----
    ff = jnp.dot(xn2.astype(jnp.bfloat16), wf_ref[...],
                 preferred_element_type=jnp.float32) + bf_ref[0]
    ff = jnp.maximum(ff, 0.0)

    # TODO(synk): lane-dense (Bb, T*C) output store skipped — the required in-kernel
    # minor-dim reshape (lane dim 32 -> T*C) risks a Mosaic relayout/lowering failure.
    o_ref[...] = (x1 + ff).reshape(Bb, T, C)   # residual 2 (+ identity dropout)


def _choose_batch_block(B, T, max_rows=1024):
    """Largest divisor of B with Bb*T <= max_rows, preferring an EVEN number of grid
    steps (shards cleanly across both v7x TensorCores; costs ~0.35 us extra on v5e/v6e)."""
    divs = [d for d in range(1, B + 1) if B % d == 0 and d * T <= max_rows]
    if not divs:
        return 1
    even = [d for d in divs if (B // d) % 2 == 0]
    return max(even) if even else max(divs)


def transformer_block(x, params, batch_block=None):
    """x: (B, T, C) float32.  params: dict of weights (see init_params)."""
    B, T, C = x.shape
    assert C == N_EMBD and T <= BLOCK_SIZE
    assert T % 8 == 0, "kernel requires T to be a multiple of 8 (sublane alignment)"

    Bb = batch_block if batch_block is not None else _choose_batch_block(B, T)
    assert B % Bb == 0

    H, hs = N_HEAD, HEAD_SIZE
    scale = float(C) ** -0.5   # PyTorch scales by C**-0.5 (n_embd), not head_size**-0.5

    # Fuse per-head Q/K/V weights/biases into (C, 3C) / (1, 3C); column h*hs+d of each
    # third corresponds to head h, dim d — matching torch.cat([...], dim=-1).
    def fuse_w(w):   # (H, C, hs) -> (C, H*hs)
        return jnp.transpose(w, (1, 0, 2)).reshape(C, H * hs)

    def fuse_b(b):   # (H, 1, hs) -> (1, H*hs)
        return jnp.transpose(b, (1, 0, 2)).reshape(1, H * hs)

    # Attention scale folded into the Q third of the fused QKV weight/bias.
    wqkv = jnp.concatenate([fuse_w(params["wq"]) * scale, fuse_w(params["wk"]),
                            fuse_w(params["wv"])], axis=1)                  # (C, 3C)
    bqkv = jnp.concatenate([fuse_b(params["bq"]) * scale, fuse_b(params["bk"]),
                            fuse_b(params["bv"])], axis=1)                  # (1, 3C)

    # Fold LayerNorm affine params into the downstream matmuls:
    #   (xn*g + b) @ W + c  ==  xn @ (g[:,None]*W) + (b @ W + c)
    wqkv_eff = params["g1"][0][:, None] * wqkv
    bqkv_eff = params["b1"] @ wqkv + bqkv
    wf_eff = params["g2"][0][:, None] * params["wf"]
    bf_eff = params["b2"] @ params["wf"] + params["bf"]

    # bf16 matmul operands (biases stay f32; in-kernel accumulation is f32).
    wqkv_bf = wqkv_eff.astype(jnp.bfloat16)
    wf_bf = wf_eff.astype(jnp.bfloat16)

    def full(shape):
        # constant index_map -> the pipeline keeps these weight blocks resident across steps
        return pl.BlockSpec(shape, lambda b, _n=len(shape): (0,) * _n)

    in_specs = [
        pl.BlockSpec((Bb, T, C), lambda b: (b, 0, 0)),          # x (Bb batch rows per step)
        full((C, 3 * C)), full((1, 3 * C)),                     # fused Wqkv (bf16), bqkv (f32)
        full((C, C)), full((1, C)),                             # feed-forward W (bf16), b (f32)
    ]
    out_spec = pl.BlockSpec((Bb, T, C), lambda b: (b, 0, 0))

    return pl.pallas_call(
        _block_kernel,
        out_shape=jax.ShapeDtypeStruct((B, T, C), jnp.float32),
        grid=(B // Bb,),
        in_specs=in_specs,
        out_specs=out_spec,
        compiler_params=pltpu.CompilerParams(dimension_semantics=("parallel",)),
    )(x, wqkv_bf, bqkv_eff, wf_bf, bf_eff)


def init_params(key):
    ks = jax.random.split(key, 8)
    s = 0.1
    return {
        "g1": jnp.ones((1, N_EMBD), jnp.float32),
        "b1": jnp.zeros((1, N_EMBD), jnp.float32),
        "g2": jnp.ones((1, N_EMBD), jnp.float32),
        "b2": jnp.zeros((1, N_EMBD), jnp.float32),
        "wq": s * jax.random.normal(ks[0], (N_HEAD, N_EMBD, HEAD_SIZE), jnp.float32),
        "bq": s * jax.random.normal(ks[1], (N_HEAD, 1, HEAD_SIZE), jnp.float32),
        "wk": s * jax.random.normal(ks[2], (N_HEAD, N_EMBD, HEAD_SIZE), jnp.float32),
        "bk": s * jax.random.normal(ks[3], (N_HEAD, 1, HEAD_SIZE), jnp.float32),
        "wv": s * jax.random.normal(ks[4], (N_HEAD, N_EMBD, HEAD_SIZE), jnp.float32),
        "bv": s * jax.random.normal(ks[5], (N_HEAD, 1, HEAD_SIZE), jnp.float32),
        "wf": s * jax.random.normal(ks[6], (N_EMBD, N_EMBD), jnp.float32),
        "bf": s * jax.random.normal(ks[7], (1, N_EMBD), jnp.float32),
    }


def _reference(x, p):
    """Pure-JAX f32 reference of the PyTorch forward (eval mode), per-head like the nn.Module."""
    def ln(v, g, b):
        mu = jnp.mean(v, -1, keepdims=True)
        var = jnp.mean((v - mu) ** 2, -1, keepdims=True)
        return (v - mu) / jnp.sqrt(var + LN_EPS) * g + b

    B, T, C = x.shape
    xn = ln(x, p["g1"][0], p["b1"][0])
    mask = jnp.tril(jnp.ones((T, T), bool))
    heads = []
    for h in range(N_HEAD):
        q = xn @ p["wq"][h] + p["bq"][h]
        k = xn @ p["wk"][h] + p["bk"][h]
        v = xn @ p["wv"][h] + p["bv"][h]
        w = jnp.einsum("btd,bsd->bts", q, k) * (C ** -0.5)
        w = jnp.where(mask, w, -jnp.inf)
        w = jax.nn.softmax(w, axis=-1)
        heads.append(jnp.einsum("bts,bsd->btd", w, v))
    x1 = x + jnp.concatenate(heads, -1)
    xn2 = ln(x1, p["g2"][0], p["b2"][0])
    ff = jnp.maximum(xn2 @ p["wf"] + p["bf"][0], 0.0)
    return x1 + ff


if __name__ == "__main__":
    key = jax.random.PRNGKey(0)
    kx, kp = jax.random.split(key)

    B, T, C = 8, 8, N_EMBD
    x = jax.random.normal(kx, (B, T, C), jnp.float32)
    params = init_params(kp)

    out = transformer_block(x, params)
    out = jax.block_until_ready(out)

    ref = _reference(x, params)
    assert out.shape == (B, T, C)
    # tolerance accounts for bf16 MXU operands (f32 accumulation) + EUP approx reciprocal
    np.testing.assert_allclose(np.asarray(out), np.asarray(ref), rtol=2e-2, atol=2e-2)

    print("KERNEL_OK")
</pallas_src>

<mosaic_0001>
module attributes {stable_mosaic.version = 11 : i64} {
  func.func @_block_kernel(%arg0: i32, %arg1: memref<4x8x32xf32, #tpu.memory_space<vmem>>, %arg2: memref<32x96xbf16, #tpu.memory_space<vmem>>, %arg3: memref<1x96xf32, #tpu.memory_space<vmem>>, %arg4: memref<32x32xbf16, #tpu.memory_space<vmem>>, %arg5: memref<1x32xf32, #tpu.memory_space<vmem>>, %arg6: memref<4x8x32xf32, #tpu.memory_space<vmem>>) attributes {dimension_semantics = [#tpu.dimension_semantics<parallel>], iteration_bounds = array<i64: 2>, scalar_prefetch = 0 : i64, scratch_operands = 0 : i64, tpu.core_type = #tpu.core_type<tc>, window_params = [{transform_indices = @transform_0, window_bounds = array<i64: 4, 8, 32>}, {pipeline_mode = #tpu.pipeline_mode<synchronous>, transform_indices = @transform_1, window_bounds = array<i64: 32, 96>}, {pipeline_mode = #tpu.pipeline_mode<synchronous>, transform_indices = @transform_2, window_bounds = array<i64: 1, 96>}, {pipeline_mode = #tpu.pipeline_mode<synchronous>, transform_indices = @transform_3, window_bounds = array<i64: 32, 32>}, {pipeline_mode = #tpu.pipeline_mode<synchronous>, transform_indices = @transform_4, window_bounds = array<i64: 1, 32>}, {transform_indices = @transform_5, window_bounds = array<i64: 4, 8, 32>}]} {
    %c0 = arith.constant 0 : index
    %c0_0 = arith.constant 0 : index
    %c0_1 = arith.constant 0 : index
    %0 = vector.load %arg1[%c0, %c0_0, %c0_1] : memref<4x8x32xf32, #tpu.memory_space<vmem>>, vector<4x8x32xf32>
    %1 = vector.shape_cast %0 : vector<4x8x32xf32> to vector<32x32xf32>
    %cst = arith.constant dense<0.000000e+00> : vector<32xf32>
    %2 = vector.multi_reduction <add>, %1, %cst [1] : vector<32x32xf32> to vector<32xf32>
    %3 = vector.shape_cast %2 : vector<32xf32> to vector<32x1xf32>
    %cst_2 = arith.constant 3.200000e+01 : f32
    %4 = vector.broadcast %cst_2 : f32 to vector<32x1xf32>
    %5 = arith.divf %3, %4 : vector<32x1xf32>
    %6 = vector.broadcast %5 : vector<32x1xf32> to vector<32x32xf32>
    %7 = arith.subf %1, %6 : vector<32x32xf32>
    %8 = arith.mulf %7, %7 : vector<32x32xf32>
    %cst_3 = arith.constant dense<0.000000e+00> : vector<32xf32>
    %9 = vector.multi_reduction <add>, %8, %cst_3 [1] : vector<32x32xf32> to vector<32xf32>
    %10 = vector.shape_cast %9 : vector<32xf32> to vector<32x1xf32>
    %cst_4 = arith.constant 3.200000e+01 : f32
    %11 = vector.broadcast %cst_4 : f32 to vector<32x1xf32>
    %12 = arith.divf %10, %11 : vector<32x1xf32>
    %13 = vector.broadcast %5 : vector<32x1xf32> to vector<32x32xf32>
    %14 = arith.subf %1, %13 : vector<32x32xf32>
    %cst_5 = arith.constant 9.99999974E-6 : f32
    %15 = vector.broadcast %cst_5 : f32 to vector<32x1xf32>
    %16 = arith.addf %12, %15 : vector<32x1xf32>
    %17 = math.rsqrt %16 : vector<32x1xf32>
    %18 = vector.broadcast %17 : vector<32x1xf32> to vector<32x32xf32>
    %19 = arith.mulf %14, %18 : vector<32x32xf32>
    %20 = arith.truncf %19 : vector<32x32xf32> to vector<32x32xbf16>
    %c0_6 = arith.constant 0 : index
    %c0_7 = arith.constant 0 : index
    %21 = vector.load %arg2[%c0_6, %c0_7] : memref<32x96xbf16, #tpu.memory_space<vmem>>, vector<32x96xbf16>
    %cst_8 = arith.constant dense<0.000000e+00> : vector<32x96xf32>
    %22 = tpu.matmul %20, %21, %cst_8 {dimension_numbers = #tpu.dot_dimension_numbers<[1], [0], [0], [1], [0, 0, 1, 1], [], []>} : vector<32x32xbf16>, vector<32x96xbf16>, vector<32x96xf32> -> vector<32x96xf32>
    %c0_9 = arith.constant 0 : index
    %c0_10 = arith.constant 0 : index
    %23 = vector.load %arg3[%c0_9, %c0_10] : memref<1x96xf32, #tpu.memory_space<vmem>>, vector<1x96xf32>
    %24 = vector.shape_cast %23 : vector<1x96xf32> to vector<96xf32>
    %25 = vector.shape_cast %24 : vector<96xf32> to vector<1x96xf32>
    %26 = vector.broadcast %25 : vector<1x96xf32> to vector<32x96xf32>
    %27 = arith.addf %22, %26 : vector<32x96xf32>
    %28 = vector.extract_strided_slice %27 {offsets = [0, 0], sizes = [32, 32], strides = [1, 1]} : vector<32x96xf32> to vector<32x32xf32>
    %29 = vector.shape_cast %28 : vector<32x32xf32> to vector<4x8x32xf32>
    %30 = arith.truncf %29 : vector<4x8x32xf32> to vector<4x8x32xbf16>
    %31 = vector.extract_strided_slice %27 {offsets = [0, 32], sizes = [32, 32], strides = [1, 1]} : vector<32x96xf32> to vector<32x32xf32>
    %32 = vector.shape_cast %31 : vector<32x32xf32> to vector<4x8x32xf32>
    %33 = arith.truncf %32 : vector<4x8x32xf32> to vector<4x8x32xbf16>
    %34 = vector.extract_strided_slice %27 {offsets = [0, 64], sizes = [32, 32], strides = [1, 1]} : vector<32x96xf32> to vector<32x32xf32>
    %35 = vector.shape_cast %34 : vector<32x32xf32> to vector<4x8x32xf32>
    %36 = arith.truncf %35 : vector<4x8x32xf32> to vector<4x8x32xbf16>
    %37 = tpu.iota {dimensions = array<i32: 1>} : vector<1x8x8xi32>
    %38 = tpu.iota {dimensions = array<i32: 2>} : vector<1x8x8xi32>
    %39 = arith.cmpi sge, %37, %38 : vector<1x8x8xi32>
    %cst_11 = arith.constant 0.000000e+00 : f32
    %cst_12 = arith.constant -1.000000e+30 : f32
    %40 = vector.broadcast %cst_11 : f32 to vector<1x8x8xf32>
    %41 = vector.broadcast %cst_12 : f32 to vector<1x8x8xf32>
    %42 = arith.select %39, %40, %41 : vector<1x8x8xi1>, vector<1x8x8xf32>
    %43 = tpu.iota {dimensions = array<i32: 2>} : vector<1x1x32xi32>
    %c0_i32 = arith.constant 0 : i32
    %44 = vector.broadcast %c0_i32 : i32 to vector<1x1x32xi32>
    %45 = arith.cmpi sge, %43, %44 : vector<1x1x32xi32>
    %c8_i32 = arith.constant 8 : i32
    %46 = vector.broadcast %c8_i32 : i32 to vector<1x1x32xi32>
    %47 = arith.cmpi slt, %43, %46 : vector<1x1x32xi32>
    %48 = arith.andi %45, %47 : vector<1x1x32xi1>
    %c8_i32_13 = arith.constant 8 : i32
    %49 = vector.broadcast %c8_i32_13 : i32 to vector<1x1x32xi32>
    %50 = arith.cmpi sge, %43, %49 : vector<1x1x32xi32>
    %c16_i32 = arith.constant 16 : i32
    %51 = vector.broadcast %c16_i32 : i32 to vector<1x1x32xi32>
    %52 = arith.cmpi slt, %43, %51 : vector<1x1x32xi32>
    %53 = arith.andi %50, %52 : vector<1x1x32xi1>
    %c16_i32_14 = arith.constant 16 : i32
    %54 = vector.broadcast %c16_i32_14 : i32 to vector<1x1x32xi32>
    %55 = arith.cmpi sge, %43, %54 : vector<1x1x32xi32>
    %c24_i32 = arith.constant 24 : i32
    %56 = vector.broadcast %c24_i32 : i32 to vector<1x1x32xi32>
    %57 = arith.cmpi slt, %43, %56 : vector<1x1x32xi32>
    %58 = arith.andi %55, %57 : vector<1x1x32xi1>
    %c24_i32_15 = arith.constant 24 : i32
    %59 = vector.broadcast %c24_i32_15 : i32 to vector<1x1x32xi32>
    %60 = arith.cmpi sge, %43, %59 : vector<1x1x32xi32>
    %c32_i32 = arith.constant 32 : i32
    %61 = vector.broadcast %c32_i32 : i32 to vector<1x1x32xi32>
    %62 = arith.cmpi slt, %43, %61 : vector<1x1x32xi32>
    %63 = arith.andi %60, %62 : vector<1x1x32xi1>
    %cst_16 = arith.constant 0.000000e+00 : f32
    %64 = arith.truncf %cst_16 : f32 to bf16
    %65 = vector.shape_cast %48 : vector<1x1x32xi1> to vector<1x1x32xi1>
    %66 = vector.broadcast %65 : vector<1x1x32xi1> to vector<4x8x32xi1>
    %67 = vector.broadcast %64 : bf16 to vector<4x8x32xbf16>
    %68 = arith.select %66, %30, %67 : vector<4x8x32xi1>, vector<4x8x32xbf16>
    %cst_17 = arith.constant 0.000000e+00 : f32
    %69 = arith.truncf %cst_17 : f32 to bf16
    %70 = vector.shape_cast %48 : vector<1x1x32xi1> to vector<1x1x32xi1>
    %71 = vector.broadcast %70 : vector<1x1x32xi1> to vector<4x8x32xi1>
    %72 = vector.broadcast %69 : bf16 to vector<4x8x32xbf16>
    %73 = arith.select %71, %36, %72 : vector<4x8x32xi1>, vector<4x8x32xbf16>
    "tpu.trace_start"() <{level = 10 : i32, message = "btc,bsc->bts"}> : () -> ()
    %cst_18 = arith.constant dense<0.000000e+00> : vector<4x8x8xf32>
    %74 = tpu.matmul %68, %33, %cst_18 {dimension_numbers = #tpu.dot_dimension_numbers<[2], [2], [1], [1], [0, 0, 0, 1, 1, 1], [0], [0]>} : vector<4x8x32xbf16>, vector<4x8x32xbf16>, vector<4x8x8xf32> -> vector<4x8x8xf32>
    "tpu.trace_stop"() : () -> ()
    %75 = vector.broadcast %42 : vector<1x8x8xf32> to vector<4x8x8xf32>
    %76 = arith.addf %74, %75 : vector<4x8x8xf32>
    %cst_19 = arith.constant dense<0xFF800000> : vector<4x8xf32>
    %77 = vector.multi_reduction <maximumf>, %76, %cst_19 [2] : vector<4x8x8xf32> to vector<4x8xf32>
    %78 = vector.shape_cast %77 : vector<4x8xf32> to vector<4x8x1xf32>
    %79 = vector.broadcast %78 : vector<4x8x1xf32> to vector<4x8x8xf32>
    %80 = arith.subf %76, %79 : vector<4x8x8xf32>
    %81 = math.exp %80 : vector<4x8x8xf32>
    %cst_20 = arith.constant dense<0.000000e+00> : vector<4x8xf32>
    %82 = vector.multi_reduction <add>, %81, %cst_20 [2] : vector<4x8x8xf32> to vector<4x8xf32>
    %83 = vector.shape_cast %82 : vector<4x8xf32> to vector<4x8x1xf32>
    %84 = tpu.reciprocal %83 {approx = true} : vector<4x8x1xf32> -> vector<4x8x1xf32>
    %85 = vector.broadcast %84 : vector<4x8x1xf32> to vector<4x8x8xf32>
    %86 = arith.mulf %81, %85 : vector<4x8x8xf32>
    %87 = arith.truncf %86 : vector<4x8x8xf32> to vector<4x8x8xbf16>
    "tpu.trace_start"() <{level = 10 : i32, message = "bts,bsc->btc"}> : () -> ()
    %cst_21 = arith.constant dense<0.000000e+00> : vector<4x8x32xf32>
    %88 = tpu.matmul %87, %73, %cst_21 {dimension_numbers = #tpu.dot_dimension_numbers<[2], [1], [1], [2], [0, 0, 0, 1, 1, 2], [0], [0]>} : vector<4x8x8xbf16>, vector<4x8x32xbf16>, vector<4x8x32xf32> -> vector<4x8x32xf32>
    %cst_22 = arith.constant 0.000000e+00 : f32
    "tpu.trace_stop"() : () -> ()
    %89 = arith.truncf %cst_22 : f32 to bf16
    %90 = vector.shape_cast %53 : vector<1x1x32xi1> to vector<1x1x32xi1>
    %91 = vector.broadcast %90 : vector<1x1x32xi1> to vector<4x8x32xi1>
    %92 = vector.broadcast %89 : bf16 to vector<4x8x32xbf16>
    %93 = arith.select %91, %30, %92 : vector<4x8x32xi1>, vector<4x8x32xbf16>
    %cst_23 = arith.constant 0.000000e+00 : f32
    %94 = arith.truncf %cst_23 : f32 to bf16
    %95 = vector.shape_cast %53 : vector<1x1x32xi1> to vector<1x1x32xi1>
    %96 = vector.broadcast %95 : vector<1x1x32xi1> to vector<4x8x32xi1>
    %97 = vector.broadcast %94 : bf16 to vector<4x8x32xbf16>
    %98 = arith.select %96, %36, %97 : vector<4x8x32xi1>, vector<4x8x32xbf16>
    "tpu.trace_start"() <{level = 10 : i32, message = "btc,bsc->bts"}> : () -> ()
    %cst_24 = arith.constant dense<0.000000e+00> : vector<4x8x8xf32>
    %99 = tpu.matmul %93, %33, %cst_24 {dimension_numbers = #tpu.dot_dimension_numbers<[2], [2], [1], [1], [0, 0, 0, 1, 1, 1], [0], [0]>} : vector<4x8x32xbf16>, vector<4x8x32xbf16>, vector<4x8x8xf32> -> vector<4x8x8xf32>
    "tpu.trace_stop"() : () -> ()
    %100 = vector.broadcast %42 : vector<1x8x8xf32> to vector<4x8x8xf32>
    %101 = arith.addf %99, %100 : vector<4x8x8xf32>
    %cst_25 = arith.constant dense<0xFF800000> : vector<4x8xf32>
    %102 = vector.multi_reduction <maximumf>, %101, %cst_25 [2] : vector<4x8x8xf32> to vector<4x8xf32>
    %103 = vector.shape_cast %102 : vector<4x8xf32> to vector<4x8x1xf32>
    %104 = vector.broadcast %103 : vector<4x8x1xf32> to vector<4x8x8xf32>
    %105 = arith.subf %101, %104 : vector<4x8x8xf32>
    %106 = math.exp %105 : vector<4x8x8xf32>
    %cst_26 = arith.constant dense<0.000000e+00> : vector<4x8xf32>
    %107 = vector.multi_reduction <add>, %106, %cst_26 [2] : vector<4x8x8xf32> to vector<4x8xf32>
    %108 = vector.shape_cast %107 : vector<4x8xf32> to vector<4x8x1xf32>
    %109 = tpu.reciprocal %108 {approx = true} : vector<4x8x1xf32> -> vector<4x8x1xf32>
    %110 = vector.broadcast %109 : vector<4x8x1xf32> to vector<4x8x8xf32>
    %111 = arith.mulf %106, %110 : vector<4x8x8xf32>
    %112 = arith.truncf %111 : vector<4x8x8xf32> to vector<4x8x8xbf16>
    "tpu.trace_start"() <{level = 10 : i32, message = "bts,bsc->btc"}> : () -> ()
    %cst_27 = arith.constant dense<0.000000e+00> : vector<4x8x32xf32>
    %113 = tpu.matmul %112, %98, %cst_27 {dimension_numbers = #tpu.dot_dimension_numbers<[2], [1], [1], [2], [0, 0, 0, 1, 1, 2], [0], [0]>} : vector<4x8x8xbf16>, vector<4x8x32xbf16>, vector<4x8x32xf32> -> vector<4x8x32xf32>
    "tpu.trace_stop"() : () -> ()
    %114 = arith.addf %88, %113 : vector<4x8x32xf32>
    %cst_28 = arith.constant 0.000000e+00 : f32
    %115 = arith.truncf %cst_28 : f32 to bf16
    %116 = vector.shape_cast %58 : vector<1x1x32xi1> to vector<1x1x32xi1>
    %117 = vector.broadcast %116 : vector<1x1x32xi1> to vector<4x8x32xi1>
    %118 = vector.broadcast %115 : bf16 to vector<4x8x32xbf16>
    %119 = arith.select %117, %30, %118 : vector<4x8x32xi1>, vector<4x8x32xbf16>
    %cst_29 = arith.constant 0.000000e+00 : f32
    %120 = arith.truncf %cst_29 : f32 to bf16
    %121 = vector.shape_cast %58 : vector<1x1x32xi1> to vector<1x1x32xi1>
    %122 = vector.broadcast %121 : vector<1x1x32xi1> to vector<4x8x32xi1>
    %123 = vector.broadcast %120 : bf16 to vector<4x8x32xbf16>
    %124 = arith.select %122, %36, %123 : vector<4x8x32xi1>, vector<4x8x32xbf16>
    "tpu.trace_start"() <{level = 10 : i32, message = "btc,bsc->bts"}> : () -> ()
    %cst_30 = arith.constant dense<0.000000e+00> : vector<4x8x8xf32>
    %125 = tpu.matmul %119, %33, %cst_30 {dimension_numbers = #tpu.dot_dimension_numbers<[2], [2], [1], [1], [0, 0, 0, 1, 1, 1], [0], [0]>} : vector<4x8x32xbf16>, vector<4x8x32xbf16>, vector<4x8x8xf32> -> vector<4x8x8xf32>
    "tpu.trace_stop"() : () -> ()
    %126 = vector.broadcast %42 : vector<1x8x8xf32> to vector<4x8x8xf32>
    %127 = arith.addf %125, %126 : vector<4x8x8xf32>
    %cst_31 = arith.constant dense<0xFF800000> : vector<4x8xf32>
    %128 = vector.multi_reduction <maximumf>, %127, %cst_31 [2] : vector<4x8x8xf32> to vector<4x8xf32>
    %129 = vector.shape_cast %128 : vector<4x8xf32> to vector<4x8x1xf32>
    %130 = vector.broadcast %129 : vector<4x8x1xf32> to vector<4x8x8xf32>
    %131 = arith.subf %127, %130 : vector<4x8x8xf32>
    %132 = math.exp %131 : vector<4x8x8xf32>
    %cst_32 = arith.constant dense<0.000000e+00> : vector<4x8xf32>
    %133 = vector.multi_reduction <add>, %132, %cst_32 [2] : vector<4x8x8xf32> to vector<4x8xf32>
    %134 = vector.shape_cast %133 : vector<4x8xf32> to vector<4x8x1xf32>
    %135 = tpu.reciprocal %134 {approx = true} : vector<4x8x1xf32> -> vector<4x8x1xf32>
    %136 = vector.broadcast %135 : vector<4x8x1xf32> to vector<4x8x8xf32>
    %137 = arith.mulf %132, %136 : vector<4x8x8xf32>
    %138 = arith.truncf %137 : vector<4x8x8xf32> to vector<4x8x8xbf16>
    "tpu.trace_start"() <{level = 10 : i32, message = "bts,bsc->btc"}> : () -> ()
    %cst_33 = arith.constant dense<0.000000e+00> : vector<4x8x32xf32>
    %139 = tpu.matmul %138, %124, %cst_33 {dimension_numbers = #tpu.dot_dimension_numbers<[2], [1], [1], [2], [0, 0, 0, 1, 1, 2], [0], [0]>} : vector<4x8x8xbf16>, vector<4x8x32xbf16>, vector<4x8x32xf32> -> vector<4x8x32xf32>
    "tpu.trace_stop"() : () -> ()
    %140 = arith.addf %114, %139 : vector<4x8x32xf32>
    %cst_34 = arith.constant 0.000000e+00 : f32
    %141 = arith.truncf %cst_34 : f32 to bf16
    %142 = vector.shape_cast %63 : vector<1x1x32xi1> to vector<1x1x32xi1>
    %143 = vector.broadcast %142 : vector<1x1x32xi1> to vector<4x8x32xi1>
    %144 = vector.broadcast %141 : bf16 to vector<4x8x32xbf16>
    %145 = arith.select %143, %30, %144 : vector<4x8x32xi1>, vector<4x8x32xbf16>
    %cst_35 = arith.constant 0.000000e+00 : f32
    %146 = arith.truncf %cst_35 : f32 to bf16
    %147 = vector.shape_cast %63 : vector<1x1x32xi1> to vector<1x1x32xi1>
    %148 = vector.broadcast %147 : vector<1x1x32xi1> to vector<4x8x32xi1>
    %149 = vector.broadcast %146 : bf16 to vector<4x8x32xbf16>
    %150 = arith.select %148, %36, %149 : vector<4x8x32xi1>, vector<4x8x32xbf16>
    "tpu.trace_start"() <{level = 10 : i32, message = "btc,bsc->bts"}> : () -> ()
    %cst_36 = arith.constant dense<0.000000e+00> : vector<4x8x8xf32>
    %151 = tpu.matmul %145, %33, %cst_36 {dimension_numbers = #tpu.dot_dimension_numbers<[2], [2], [1], [1], [0, 0, 0, 1, 1, 1], [0], [0]>} : vector<4x8x32xbf16>, vector<4x8x32xbf16>, vector<4x8x8xf32> -> vector<4x8x8xf32>
    "tpu.trace_stop"() : () -> ()
    %152 = vector.broadcast %42 : vector<1x8x8xf32> to vector<4x8x8xf32>
    %153 = arith.addf %151, %152 : vector<4x8x8xf32>
    %cst_37 = arith.constant dense<0xFF800000> : vector<4x8xf32>
    %154 = vector.multi_reduction <maximumf>, %153, %cst_37 [2] : vector<4x8x8xf32> to vector<4x8xf32>
    %155 = vector.shape_cast %154 : vector<4x8xf32> to vector<4x8x1xf32>
    %156 = vector.broadcast %155 : vector<4x8x1xf32> to vector<4x8x8xf32>
    %157 = arith.subf %153, %156 : vector<4x8x8xf32>
    %158 = math.exp %157 : vector<4x8x8xf32>
    %cst_38 = arith.constant dense<0.000000e+00> : vector<4x8xf32>
    %159 = vector.multi_reduction <add>, %158, %cst_38 [2] : vector<4x8x8xf32> to vector<4x8xf32>
    %160 = vector.shape_cast %159 : vector<4x8xf32> to vector<4x8x1xf32>
    %161 = tpu.reciprocal %160 {approx = true} : vector<4x8x1xf32> -> vector<4x8x1xf32>
    %162 = vector.broadcast %161 : vector<4x8x1xf32> to vector<4x8x8xf32>
    %163 = arith.mulf %158, %162 : vector<4x8x8xf32>
    %164 = arith.truncf %163 : vector<4x8x8xf32> to vector<4x8x8xbf16>
    "tpu.trace_start"() <{level = 10 : i32, message = "bts,bsc->btc"}> : () -> ()
    %cst_39 = arith.constant dense<0.000000e+00> : vector<4x8x32xf32>
    %165 = tpu.matmul %164, %150, %cst_39 {dimension_numbers = #tpu.dot_dimension_numbers<[2], [1], [1], [2], [0, 0, 0, 1, 1, 2], [0], [0]>} : vector<4x8x8xbf16>, vector<4x8x32xbf16>, vector<4x8x32xf32> -> vector<4x8x32xf32>
    "tpu.trace_stop"() : () -> ()
    %166 = arith.addf %140, %165 : vector<4x8x32xf32>
    %167 = vector.shape_cast %166 : vector<4x8x32xf32> to vector<32x32xf32>
    %168 = arith.addf %1, %167 : vector<32x32xf32>
    %cst_40 = arith.constant dense<0.000000e+00> : vector<32xf32>
    %169 = vector.multi_reduction <add>, %168, %cst_40 [1] : vector<32x32xf32> to vector<32xf32>
    %170 = vector.shape_cast %169 : vector<32xf32> to vector<32x1xf32>
    %cst_41 = arith.constant 3.200000e+01 : f32
    %171 = vector.broadcast %cst_41 : f32 to vector<32x1xf32>
    %172 = arith.divf %170, %171 : vector<32x1xf32>
    %173 = vector.broadcast %172 : vector<32x1xf32> to vector<32x32xf32>
    %174 = arith.subf %168, %173 : vector<32x32xf32>
    %175 = arith.mulf %174, %174 : vector<32x32xf32>
    %cst_42 = arith.constant dense<0.000000e+00> : vector<32xf32>
    %176 = vector.multi_reduction <add>, %175, %cst_42 [1] : vector<32x32xf32> to vector<32xf32>
    %177 = vector.shape_cast %176 : vector<32xf32> to vector<32x1xf32>
    %cst_43 = arith.constant 3.200000e+01 : f32
    %178 = vector.broadcast %cst_43 : f32 to vector<32x1xf32>
    %179 = arith.divf %177, %178 : vector<32x1xf32>
    %180 = vector.broadcast %172 : vector<32x1xf32> to vector<32x32xf32>
    %181 = arith.subf %168, %180 : vector<32x32xf32>
    %cst_44 = arith.constant 9.99999974E-6 : f32
    %182 = vector.broadcast %cst_44 : f32 to vector<32x1xf32>
    %183 = arith.addf %179, %182 : vector<32x1xf32>
    %184 = math.rsqrt %183 : vector<32x1xf32>
    %185 = vector.broadcast %184 : vector<32x1xf32> to vector<32x32xf32>
    %186 = arith.mulf %181, %185 : vector<32x32xf32>
    %187 = arith.truncf %186 : vector<32x32xf32> to vector<32x32xbf16>
    %c0_45 = arith.constant 0 : index
    %c0_46 = arith.constant 0 : index
    %188 = vector.load %arg4[%c0_45, %c0_46] : memref<32x32xbf16, #tpu.memory_space<vmem>>, vector<32x32xbf16>
    %cst_47 = arith.constant dense<0.000000e+00> : vector<32x32xf32>
    %189 = tpu.matmul %187, %188, %cst_47 {dimension_numbers = #tpu.dot_dimension_numbers<[1], [0], [0], [1], [0, 0, 1, 1], [], []>} : vector<32x32xbf16>, vector<32x32xbf16>, vector<32x32xf32> -> vector<32x32xf32>
    %c0_48 = arith.constant 0 : index
    %c0_49 = arith.constant 0 : index
    %190 = vector.load %arg5[%c0_48, %c0_49] : memref<1x32xf32, #tpu.memory_space<vmem>>, vector<1x32xf32>
    %191 = vector.shape_cast %190 : vector<1x32xf32> to vector<32xf32>
    %192 = vector.shape_cast %191 : vector<32xf32> to vector<1x32xf32>
    %193 = vector.broadcast %192 : vector<1x32xf32> to vector<32x32xf32>
    %194 = arith.addf %189, %193 : vector<32x32xf32>
    %cst_50 = arith.constant 0.000000e+00 : f32
    %195 = vector.broadcast %cst_50 : f32 to vector<32x32xf32>
    %196 = arith.maximumf %194, %195 : vector<32x32xf32>
    %197 = arith.addf %168, %196 : vector<32x32xf32>
    %198 = vector.shape_cast %197 : vector<32x32xf32> to vector<4x8x32xf32>
    %c0_51 = arith.constant 0 : index
    %c0_52 = arith.constant 0 : index
    %c0_53 = arith.constant 0 : index
    %199 = vector.load %arg6[%c0_51, %c0_52, %c0_53] : memref<4x8x32xf32, #tpu.memory_space<vmem>>, vector<4x8x32xf32>
    tpu.vector_store %arg6[%c0_51, %c0_52, %c0_53], %198 {strides = array<i32>} : memref<4x8x32xf32, #tpu.memory_space<vmem>>, vector<4x8x32xf32>,
    return
  }
  func.func @transform_0(%arg0: i32) -> (i32, i32, i32) {
    %c0_i32 = arith.constant 0 : i32
    %c0_i32_0 = arith.constant 0 : i32
    %c0_i32_1 = arith.constant 0 : i32
    return %arg0, %c0_i32, %c0_i32_0 : i32, i32, i32
  }
  func.func @transform_1(%arg0: i32) -> (i32, i32) {
    %c0_i32 = arith.constant 0 : i32
    %c0_i32_0 = arith.constant 0 : i32
    %c0_i32_1 = arith.constant 0 : i32
    return %c0_i32, %c0_i32_0 : i32, i32
  }
  func.func @transform_2(%arg0: i32) -> (i32, i32) {
    %c0_i32 = arith.constant 0 : i32
    %c0_i32_0 = arith.constant 0 : i32
    %c0_i32_1 = arith.constant 0 : i32
    return %c0_i32, %c0_i32_0 : i32, i32
  }
  func.func @transform_3(%arg0: i32) -> (i32, i32) {
    %c0_i32 = arith.constant 0 : i32
    %c0_i32_0 = arith.constant 0 : i32
    %c0_i32_1 = arith.constant 0 : i32
    return %c0_i32, %c0_i32_0 : i32, i32
  }
  func.func @transform_4(%arg0: i32) -> (i32, i32) {
    %c0_i32 = arith.constant 0 : i32
    %c0_i32_0 = arith.constant 0 : i32
    %c0_i32_1 = arith.constant 0 : i32
    return %c0_i32, %c0_i32_0 : i32, i32
  }
  func.func @transform_5(%arg0: i32) -> (i32, i32, i32) {
    %c0_i32 = arith.constant 0 : i32
    %c0_i32_0 = arith.constant 0 : i32
    %c0_i32_1 = arith.constant 0 : i32
    return %arg0, %c0_i32, %c0_i32_0 : i32, i32, i32
  }
}

</mosaic_0001>

<llo_original>
// kernel: tpu_custom_call.1
$region0: #{tpu_custom_call.1}
  #allocation0 [shape = 'u32[]', space=smem, size = 0x4, offset = 0x4, fixed_abs, tag = 'smem constant byte address 0x4 - core index']
  #allocation1 [shape = 'u32[72,128]{1,0:T(1,128)}', space=vmem, size = 0x9000, scoped, tag = 'internal scratch']
  %s0 = inlined_call_operand.hbm [shape: f32[8,8,32], index: 0, kind: input, shape index: {}]
  %s1 = inlined_call_operand.hbm [shape: bf16[32,96], index: 1, kind: input, shape index: {}]
  %s2 = inlined_call_operand.vmem [shape: f32[1,96], index: 2, kind: input, shape index: {}]
  %s3 = inlined_call_operand.hbm [shape: bf16[32,32], index: 3, kind: input, shape index: {}]
  %s4 = inlined_call_operand.vmem [shape: f32[1,32], index: 4, kind: input, shape index: {}]
  %s5 = inlined_call_operand.hbm [shape: f32[8,8,32], index: 5, kind: output, shape index: {}]
  %s6 = sld [smem:[#allocation0]]
  $region65: #{tpu_custom_call.1} parent=0
    _
  %s8 = ssub.s32 1, %s6
  %s9 = scalar_select 0, %s8, %s6
  $region1: #{tpu_custom_call.1} parent=0
    #allocation2 [shape = 'u8[32768]{0}', space=vmem, size = 0x8000, scoped, tag = 'input window, operand 0']
    #allocation3 [shape = 's32[2]{0}', space=sflag, size = 0x8, scoped, tag = 'scoped memory for tpu_custom_call.1']
    #allocation4 [shape = 's32[2]{0}', space=sflag, size = 0x8, scoped, tag = 'scoped memory for tpu_custom_call.1']
    #allocation5 [shape = 'u8[8192]{0}', space=vmem, size = 0x2000, scoped, tag = 'input window, operand 1, single buffered']
    #allocation6 [shape = 's32[1]{0}', space=sflag, size = 0x4, scoped, tag = 'scoped memory for tpu_custom_call.1']
    #allocation7 [shape = 'u8[8192]{0}', space=vmem, size = 0x2000, scoped, tag = 'input window, operand 3, single buffered']
    #allocation8 [shape = 'u8[32768]{0}', space=vmem, size = 0x8000, scoped, tag = 'output window, operand 0']
    %10 = vsyncpa [#allocation3], 0
    %s11 = scalar_lea.sflag [#allocation3], 1
    %12 = vsyncpa %s11, 0
    %13 = vsyncpa [#allocation6], 0
    %14 = vsyncpa [#allocation4], 0
    %s15 = scalar_lea.sflag [#allocation4], 1
    %16 = vsyncpa %s15, 0
    loop: start=0, step=1, limit=4
    $region2: #{tpu_custom_call.1} parent=1 // loop_pre_header
      _
    $region3: #{tpu_custom_call.1} parent=1 // loop_header
      %s18 = sphi 0, %s22
      %p19 = scmp.ge.s32.totalorder %s18, 4
      %s28 = sphi 0, %s30
      %s31 = sphi 0, %s28
      %s32 = sphi 0, %s31
      %s48 = sphi 0, %s32
      %s52 = sphi 0, %s52
      %s54 = sphi 0, %s52
      %s55 = sphi 0, %s54
      %s69 = sphi 0, %s55
      %s73 = sphi 0, %s73
      %s75 = sphi 0, %s73
      %s76 = sphi 0, %s75
      %s90 = sphi 0, %s76
      %s94 = sphi 0, %s94
      %s96 = sphi 0, %s94
      %s97 = sphi 0, %s96
      %s111 = sphi 0, %s97
      %s115 = sphi 0, %s115
      %s117 = sphi 0, %s115
      %s118 = sphi 0, %s117
      %s132 = sphi 0, %s118
      %s138 = sphi 0, %s140
      %s141 = sphi 0, %s138
      %s142 = sphi 0, %s141
      %s158 = sphi 0, %s142
    $region4: #{tpu_custom_call.1} parent=1 // loop_header_branch
      %21 = sbr.rel (%p19) target = $region8
    $region5: #{tpu_custom_call.1} parent=1 // loop_body
      %s23 = ssub.s32 %s18, 1
      %s24 = ssub.s32 %s18, 2
      %s25 = sadd.s32 %s18, 1
      %s26 = ssub.s32 %s18, %s25
      %p27 = scmp.eq.s32.totalorder %s26, 0
      %s29 = sadd.s32 %s28, 1
      %s30 = scalar_select %p27, %s28, %s29
      %p33 = pneg %p27
      %p34 = scmp.eq.s32.totalorder %s18, 1
      %p35 = por %p33, %p34
      %p36 = scmp.ne.s32.totalorder %s28, %s31
      %p37 = scmp.eq.s32.totalorder %s18, 0
      %p38 = por %p36, %p37
      %p39 = scmp.ne.s32.totalorder %s28, %s31
      %p40 = scmp.eq.s32.totalorder %s23, 1
      %p41 = por %p39, %p40
      %p42 = scmp.ne.s32.totalorder %s31, %s32
      %p43 = scmp.eq.s32.totalorder %s23, 0
      %p44 = por %p42, %p43
      %p45 = scmp.ne.s32.totalorder %s31, %s32
      %p46 = scmp.eq.s32.totalorder %s24, 1
      %p47 = por %p45, %p46
      %p49 = scmp.ne.s32.totalorder %s32, %s48
      %p50 = scmp.eq.s32.totalorder %s24, 0
      %p51 = por %p49, %p50
      %s53 = sadd.s32 %s52, 1
      %p56 = scmp.eq.s32.totalorder %s18, 1
      %p57 = scmp.ne.s32.totalorder %s52, %s54
      %p58 = scmp.eq.s32.totalorder %s18, 0
      %p59 = por %p57, %p58
      %p60 = scmp.ne.s32.totalorder %s52, %s54
      %p61 = scmp.eq.s32.totalorder %s23, 1
      %p62 = por %p60, %p61
      %p63 = scmp.ne.s32.totalorder %s54, %s55
      %p64 = scmp.eq.s32.totalorder %s23, 0
      %p65 = por %p63, %p64
      %p66 = scmp.ne.s32.totalorder %s54, %s55
      %p67 = scmp.eq.s32.totalorder %s24, 1
      %p68 = por %p66, %p67
      %p70 = scmp.ne.s32.totalorder %s55, %s69
      %p71 = scmp.eq.s32.totalorder %s24, 0
      %p72 = por %p70, %p71
      %s74 = sadd.s32 %s73, 1
      %p77 = scmp.eq.s32.totalorder %s18, 1
      %p78 = scmp.ne.s32.totalorder %s73, %s75
      %p79 = scmp.eq.s32.totalorder %s18, 0
      %p80 = por %p78, %p79
      %p81 = scmp.ne.s32.totalorder %s73, %s75
      %p82 = scmp.eq.s32.totalorder %s23, 1
      %p83 = por %p81, %p82
      %p84 = scmp.ne.s32.totalorder %s75, %s76
      %p85 = scmp.eq.s32.totalorder %s23, 0
      %p86 = por %p84, %p85
      %p87 = scmp.ne.s32.totalorder %s75, %s76
      %p88 = scmp.eq.s32.totalorder %s24, 1
      %p89 = por %p87, %p88
      %p91 = scmp.ne.s32.totalorder %s76, %s90
      %p92 = scmp.eq.s32.totalorder %s24, 0
      %p93 = por %p91, %p92
      %s95 = sadd.s32 %s94, 1
      %p98 = scmp.eq.s32.totalorder %s18, 1
      %p99 = scmp.ne.s32.totalorder %s94, %s96
      %p100 = scmp.eq.s32.totalorder %s18, 0
      %p101 = por %p99, %p100
      %p102 = scmp.ne.s32.totalorder %s94, %s96
      %p103 = scmp.eq.s32.totalorder %s23, 1
      %p104 = por %p102, %p103
      %p105 = scmp.ne.s32.totalorder %s96, %s97
      %p106 = scmp.eq.s32.totalorder %s23, 0
      %p107 = por %p105, %p106
      %p108 = scmp.ne.s32.totalorder %s96, %s97
      %p109 = scmp.eq.s32.totalorder %s24, 1
      %p110 = por %p108, %p109
      %p112 = scmp.ne.s32.totalorder %s97, %s111
      %p113 = scmp.eq.s32.totalorder %s24, 0
      %p114 = por %p112, %p113
      %s116 = sadd.s32 %s115, 1
      %p119 = scmp.eq.s32.totalorder %s18, 1
      %p120 = scmp.ne.s32.totalorder %s115, %s117
      %p121 = scmp.eq.s32.totalorder %s18, 0
      %p122 = por %p120, %p121
      %p123 = scmp.ne.s32.totalorder %s115, %s117
      %p124 = scmp.eq.s32.totalorder %s23, 1
      %p125 = por %p123, %p124
      %p126 = scmp.ne.s32.totalorder %s117, %s118
      %p127 = scmp.eq.s32.totalorder %s23, 0
      %p128 = por %p126, %p127
      %p129 = scmp.ne.s32.totalorder %s117, %s118
      %p130 = scmp.eq.s32.totalorder %s24, 1
      %p131 = por %p129, %p130
      %p133 = scmp.ne.s32.totalorder %s118, %s132
      %p134 = scmp.eq.s32.totalorder %s24, 0
      %p135 = por %p133, %p134
      %s136 = ssub.s32 %s18, %s25
      %p137 = scmp.eq.s32.totalorder %s136, 0
      %s139 = sadd.s32 %s138, 1
      %s140 = scalar_select %p137, %s138, %s139
      %p143 = pneg %p137
      %p144 = scmp.eq.s32.totalorder %s18, 1
      %p145 = por %p143, %p144
      %p146 = scmp.ne.s32.totalorder %s138, %s141
      %p147 = scmp.eq.s32.totalorder %s18, 0
      %p148 = por %p146, %p147
      %p149 = scmp.ne.s32.totalorder %s138, %s141
      %p150 = scmp.eq.s32.totalorder %s23, 1
      %p151 = por %p149, %p150
      %p152 = scmp.ne.s32.totalorder %s141, %s142
      %p153 = scmp.eq.s32.totalorder %s23, 0
      %p154 = por %p152, %p153
      %p155 = scmp.ne.s32.totalorder %s141, %s142
      %p156 = scmp.eq.s32.totalorder %s24, 1
      %p157 = por %p155, %p156
      %p159 = scmp.ne.s32.totalorder %s142, %s158
      %p160 = scmp.eq.s32.totalorder %s24, 0
      %p161 = por %p159, %p160
      %p162 = scmp.le.s32.totalorder 1, %s18
      %p163 = scmp.lt.s32.totalorder %s18, 3
      %p164 = pnand %p162, %p163
      %p165 = pneg %p164
      // Predicated region
      $region9: #{tpu_custom_call.1} parent=5 // pred_check
        _
      $region10: #{tpu_custom_call.1} parent=5 // pred_check_branch
        %167 = sbr.rel (%p164) target = $region12
      $region11: #{tpu_custom_call.1} parent=5 // pred_region
        %s168 = ssub.s32 %s18, 1
        // Predicated region
        $region13: #{tpu_custom_call.1} parent=11 // pred_check
          %p169 = pneg %p65
        $region14: #{tpu_custom_call.1} parent=11 // pred_check_branch
          %171 = sbr.rel (%p169) target = $region16
        $region15: #{tpu_custom_call.1} parent=11 // pred_region
          %173 = vsyncadd [#allocation6], 0
          %s174 = sshll.u32 %s1, 4
          %s175 = int_to_ptr.hbm [resolvable:$true] %s174
          %s176 = sshll.u32 [#allocation5], 4
          %s177 = int_to_ptr.vmem [resolvable:$true] %s176
          %182 = dma.hbm_to_vmem [thread:$0]  %s175, 256, %s177, [#allocation6], 64, 64, 4
        $region16: #{tpu_custom_call.1} parent=11 // pred_fallthru
          _
        // Predicated region
        $region17: #{tpu_custom_call.1} parent=11 // pred_check
          %p183 = pneg %p86
        $region18: #{tpu_custom_call.1} parent=11 // pred_check_branch
          %185 = sbr.rel (%p183) target = $region20
        $region19: #{tpu_custom_call.1} parent=11 // pred_region
          _
        $region20: #{tpu_custom_call.1} parent=11 // pred_fallthru
          _
        // Predicated region
        $region21: #{tpu_custom_call.1} parent=11 // pred_check
          %p186 = pneg %p107
        $region22: #{tpu_custom_call.1} parent=11 // pred_check_branch
          %188 = sbr.rel (%p186) target = $region24
        $region23: #{tpu_custom_call.1} parent=11 // pred_region
          %190 = vsyncadd [#allocation6], 0
          %s191 = sshll.u32 %s3, 4
          %s192 = int_to_ptr.hbm [resolvable:$true] %s191
          %s193 = sshll.u32 [#allocation7], 4
          %s194 = int_to_ptr.vmem [resolvable:$true] %s193
          %199 = dma.hbm_to_vmem [thread:$0]  %s192, 256, %s194, [#allocation6], 64, 64, 4
        $region24: #{tpu_custom_call.1} parent=11 // pred_fallthru
          _
        // Predicated region
        $region25: #{tpu_custom_call.1} parent=11 // pred_check
          %p200 = pneg %p128
        $region26: #{tpu_custom_call.1} parent=11 // pred_check_branch
          %202 = sbr.rel (%p200) target = $region28
        $region27: #{tpu_custom_call.1} parent=11 // pred_region
          _
        $region28: #{tpu_custom_call.1} parent=11 // pred_fallthru
          _
      $region12: #{tpu_custom_call.1} parent=5 // pred_fallthru
        _
      %p203 = scmp.lt.s32.totalorder %s18, 2
      // Predicated region
      $region29: #{tpu_custom_call.1} parent=5 // pred_check
        %p204 = pneg %p203
      $region30: #{tpu_custom_call.1} parent=5 // pred_check_branch
        %206 = sbr.rel (%p204) target = $region32
      $region31: #{tpu_custom_call.1} parent=5 // pred_region
        // Predicated region
        $region33: #{tpu_custom_call.1} parent=31 // pred_check
          %p207 = pneg %p38
        $region34: #{tpu_custom_call.1} parent=31 // pred_check_branch
          %209 = sbr.rel (%p207) target = $region36
        $region35: #{tpu_custom_call.1} parent=31 // pred_region
          %s210 = sand.u32 %s28, 1
          %s211 = scalar_lea.sflag [#allocation3], %s210
          %s212 = sand.u32 %s28, 1
          %s213 = smul.addr %s212, 32
          %s214 = scalar_lea.vmem [#allocation2], %s213
          %s215 = smul.u32 4, %s18
          %217 = vsyncadd %s211, 0
          %s218 = smul.addr %s215, 8
          %s219 = scalar_lea.hbm %s0, %s218
          %s220 = sshll.u32 %s219, 4
          %s221 = int_to_ptr.hbm [resolvable:$true] %s220
          %s222 = sshll.u32 %s214, 4
          %s223 = int_to_ptr.vmem [resolvable:$true] %s222
          %228 = dma.hbm_to_vmem [thread:$0]  %s221, 512, %s223, %s211, 128, 128, 8
        $region36: #{tpu_custom_call.1} parent=31 // pred_fallthru
          _
      $region32: #{tpu_custom_call.1} parent=5 // pred_fallthru
        _
      %p229 = scmp.le.s32.totalorder 1, %s18
      %p230 = scmp.lt.s32.totalorder %s18, 3
      %p231 = pnand %p229, %p230
      %p232 = pneg %p231
      // Predicated region
      $region37: #{tpu_custom_call.1} parent=5 // pred_check
        _
      $region38: #{tpu_custom_call.1} parent=5 // pred_check_branch
        %234 = sbr.rel (%p231) target = $region40
      $region39: #{tpu_custom_call.1} parent=5 // pred_region
        %s235 = ssub.s32 %s18, 1
        %s236 = sand.u32 %s31, 1
        %s237 = scalar_lea.sflag [#allocation3], %s236
        %s238 = sand.u32 %s31, 1
        %s239 = smul.addr %s238, 32
        %s240 = scalar_lea.vmem [#allocation2], %s239
        // Predicated region
        $region41: #{tpu_custom_call.1} parent=39 // pred_check
          %p241 = pneg %p44
        $region42: #{tpu_custom_call.1} parent=39 // pred_check_branch
          %243 = sbr.rel (%p241) target = $region44
        $region43: #{tpu_custom_call.1} parent=39 // pred_region
          %245 = dma.done %s237, 512
        $region44: #{tpu_custom_call.1} parent=39 // pred_fallthru
          _
        // Predicated region
        $region45: #{tpu_custom_call.1} parent=39 // pred_check
          %p246 = pneg %p65
        $region46: #{tpu_custom_call.1} parent=39 // pred_check_branch
          %248 = sbr.rel (%p246) target = $region48
        $region47: #{tpu_custom_call.1} parent=39 // pred_region
          %250 = dma.done [#allocation6], 256
        $region48: #{tpu_custom_call.1} parent=39 // pred_fallthru
          _
        // Predicated region
        $region49: #{tpu_custom_call.1} parent=39 // pred_check
          %p251 = pneg %p107
        $region50: #{tpu_custom_call.1} parent=39 // pred_check_branch
          %253 = sbr.rel (%p251) target = $region52
        $region51: #{tpu_custom_call.1} parent=39 // pred_region
          %255 = dma.done [#allocation6], 256
        $region52: #{tpu_custom_call.1} parent=39 // pred_fallthru
          _
        %s256 = sand.u32 %s31, 1
        %s257 = scalar_lea.sflag [#allocation3], %s256
        %s258 = sand.u32 %s31, 1
        %s259 = smul.addr %s258, 32
        %s260 = scalar_lea.vmem [#allocation2], %s259
        %p261 = pneg %p44
        %p262 = pneg %p41
        %p263 = pneg %p65
        %p264 = pneg %p62
        %p265 = pneg %p86
        %p266 = pneg %p83
        %p267 = pneg %p107
        %p268 = pneg %p104
        %p269 = pneg %p128
        %p270 = pneg %p125
        %p271 = pneg %p154
        %p272 = pneg %p151
        %s273 = sand.u32 %s141, 1
        %s274 = scalar_lea.sflag [#allocation4], %s273
        %s275 = sand.u32 %s141, 1
        %s276 = smul.addr %s275, 32
        %s277 = scalar_lea.vmem [#allocation8], %s276
        %s278 = smul.u32 4, %s23
        %s279 = smul.u32 4, %s23
        %v283 = vld [vmem:[%s240] sm:$0xff]
        %v284 = vld [vmem:[%s240 + $0x8] sm:$0xff]
        %v285 = vld [vmem:[%s240 + $0x10] sm:$0xff]
        %v286 = vld [vmem:[%s240 + $0x18] sm:$0xff]
        %vm287 = vcmask 261120
        %v288 = vsel %vm287, %v283, 0.0
        %289 = vadd.xlane.f32.xlu0 %v288
        %v290 = vpop.xlane.xlu0 %289
        %v291 = vsel %vm287, %v284, 0.0
        %292 = vadd.xlane.f32.xlu0 %v291
        %v293 = vpop.xlane.xlu0 %292
        %v294 = vsel %vm287, %v285, 0.0
        %295 = vadd.xlane.f32.xlu0 %v294
        %v296 = vpop.xlane.xlu0 %295
        %v297 = vsel %vm287, %v286, 0.0
        %298 = vadd.xlane.f32.xlu0 %v297
        %v299 = vpop.xlane.xlu0 %298
        %v300 = vrcp.pop 32.0
        %v301 = vmul.f32 32.0, %v300
        %v302 = vsub.f32 1.0, %v301
        %v303 = vmul.f32 %v300, %v302
        %v304 = vadd.f32 %v300, %v303
        %vm305 = vweird.f32 %v300
        %v306 = vsel %vm305, %v300, %v304
        %v307 = vmul.f32 %v290, %v306
        %v308 = vmul.f32 %v293, %v306
        %v309 = vmul.f32 %v296, %v306
        %v310 = vmul.f32 %v299, %v306
        %v311 = vsub.f32 %v283, %v307
        %v312 = vsub.f32 %v284, %v308
        %v313 = vsub.f32 %v285, %v309
        %v314 = vsub.f32 %v286, %v310
        %v315 = vmul.f32 %v311, %v311
        %v316 = vmul.f32 %v312, %v312
        %v317 = vmul.f32 %v313, %v313
        %v318 = vmul.f32 %v314, %v314
        %v319 = vsel %vm287, %v315, 0.0
        %320 = vadd.xlane.f32.xlu0 %v319
        %v321 = vpop.xlane.xlu0 %320
        %v322 = vsel %vm287, %v316, 0.0
        %323 = vadd.xlane.f32.xlu0 %v322
        %v324 = vpop.xlane.xlu0 %323
        %v325 = vsel %vm287, %v317, 0.0
        %326 = vadd.xlane.f32.xlu0 %v325
        %v327 = vpop.xlane.xlu0 %326
        %v328 = vsel %vm287, %v318, 0.0
        %329 = vadd.xlane.f32.xlu0 %v328
        %v330 = vpop.xlane.xlu0 %329
        %v331 = vmul.f32 %v321, %v306
        %v332 = vmul.f32 %v324, %v306
        %v333 = vmul.f32 %v327, %v306
        %v334 = vmul.f32 %v330, %v306
        %v335 = vadd.f32 %v331, 1e-05
        %v336 = vadd.f32 %v332, 1e-05
        %v337 = vadd.f32 %v333, 1e-05
        %v338 = vadd.f32 %v334, 1e-05
        %v339 = vrsqrt.pop %v335
        %v340 = vmul.f32 %v339, %v335
        %v341 = vmul.f32 %v340, %v339
        %v342 = vmul.f32 0.5, %v341
        %v343 = vsub.f32 1.5, %v342
        %v344 = vmul.f32 %v339, %v343
        %vm345 = vweird.f32 %v335
        %vm346 = vweird.f32 %v339
        %vm347 = vmor %vm345, %vm346
        %v348 = vsel %vm347, %v339, %v344
        %v349 = vrsqrt.pop %v336
        %v350 = vmul.f32 %v349, %v336
        %v351 = vmul.f32 %v350, %v349
        %v352 = vmul.f32 0.5, %v351
        %v353 = vsub.f32 1.5, %v352
        %v354 = vmul.f32 %v349, %v353
        %vm355 = vweird.f32 %v336
        %vm356 = vweird.f32 %v349
        %vm357 = vmor %vm355, %vm356
        %v358 = vsel %vm357, %v349, %v354
        %v359 = vrsqrt.pop %v337
        %v360 = vmul.f32 %v359, %v337
        %v361 = vmul.f32 %v360, %v359
        %v362 = vmul.f32 0.5, %v361
        %v363 = vsub.f32 1.5, %v362
        %v364 = vmul.f32 %v359, %v363
        %vm365 = vweird.f32 %v337
        %vm366 = vweird.f32 %v359
        %vm367 = vmor %vm365, %vm366
        %v368 = vsel %vm367, %v359, %v364
        %v369 = vrsqrt.pop %v338
        %v370 = vmul.f32 %v369, %v338
        %v371 = vmul.f32 %v370, %v369
        %v372 = vmul.f32 0.5, %v371
        %v373 = vsub.f32 1.5, %v372
        %v374 = vmul.f32 %v369, %v373
        %vm375 = vweird.f32 %v338
        %vm376 = vweird.f32 %v369
        %vm377 = vmor %vm375, %vm376
        %v378 = vsel %vm377, %v369, %v374
        %v379 = vmul.f32 %v311, %v348
        %v380 = vmul.f32 %v312, %v358
        %v381 = vmul.f32 %v313, %v368
        %v382 = vmul.f32 %v314, %v378
        %v383 = vpack.c.bf16 %v380, %v379
        %v384 = vpack.c.bf16 %v382, %v381
        %v385 = vld [vmem:[#allocation5] sm:$0xf]
        %v386 = vld [vmem:[#allocation5 + $0x4] sm:$0xf]
        %v387 = vld [vmem:[#allocation5 + $0x8] sm:$0xf]
        %v388 = vld [vmem:[#allocation5 + $0xc] sm:$0xf]
        %v389 = vld [vmem:[%s2] sm:$0x1]
        %v391 = vperm.slane %v389, 0
        %v397 = vunpack.c.l.b16 %v385
        %v398 = vunpack.c.l.b16 %v386
        %v399 = vunpack.c.l.b16 %v387
        %v400 = vunpack.c.l.b16 %v388
        %v401 = vpack.c.b16 %v398, %v397
        %v402 = vpack.c.b16 %v400, %v399
        %v406 = vsel %vm287, %v383, 0
        %v409 = vsel %vm287, %v384, 0
        %411 = vmatpush.bf16.msra.mxu0 0
        %412 = vmatpush.bf16.msra.mxu0 0
        %413 = vmatpush.bf16.msra.mxu0 0
        %414 = vmatpush.bf16.msra.mxu0 0
        %415 = vmatpush.bf16.msra.mxu0 0
        %416 = vmatpush.bf16.msra.mxu0 0
        %417 = vmatpush.bf16.msra.mxu0 %v402
        %418 = vmatpush.bf16.msra.mxu0 %v401
        %419 = vmatmul.bf16.gmra.mxu0 %v406
        %v420 = vpop.f32.mrf.mxu0
        %v421 = vadd.f32 %v391, %v420
        %v422 = vpop.f32.mrf.mxu0
        %v423 = vadd.f32 %v391, %v422
        %424 = vmatmul.bf16.gmra.mxu0 %v409
        %v425 = vpop.f32.mrf.mxu0
        %v426 = vadd.f32 %v391, %v425
        %v427 = vpop.f32.mrf.mxu0
        %v428 = vadd.f32 %v391, %v427
        %429 = vdwg.mxu0
        %v430 = vpack.c.bf16 %v421, %v421
        %v431 = vpack.c.bf16 %v423, %v423
        %v432 = vpack.c.bf16 %v426, %v426
        %v433 = vpack.c.bf16 %v428, %v428
        %v434 = vlaneseq
        %v435 = vshrl.u32 %v434, 7
        %v436 = vlaneseq
        %v437 = vand.u32 %v436, 127
        %vm438 = vcmp.ge.s32.totalorder %v435, %v437
        %v439 = vsel %vm438, 0.0, -1e+30
        %vm440 = vcmp.ge.s32.totalorder %v437, 0
        %vm441 = vcmp.lt.s32.totalorder %v437, 8
        %vm442 = vmand %vm440, %vm441
        %vm443 = vcmp.ge.s32.totalorder %v437, 8
        %vm444 = vcmp.lt.s32.totalorder %v437, 16
        %vm445 = vmand %vm443, %vm444
        %vm446 = vcmp.ge.s32.totalorder %v437, 16
        %vm447 = vcmp.lt.s32.totalorder %v437, 24
        %vm448 = vmand %vm446, %vm447
        %vm449 = vcmp.ge.s32.totalorder %v437, 24
        %vm450 = vcmp.lt.s32.totalorder %v437, 32
        %vm451 = vmand %vm449, %vm450
        %v452 = vsel %vm442, 1, 0
        %vm453 = vcmp.eq.s32.totalorder %v452, 1
        %vm454 = vmpackc.low %vm453, %vm453
        %v455 = vsel %vm454, %v430, 0
        %v456 = vsel %vm454, %v431, 0
        %v457 = vsel %vm454, %v432, 0
        %v458 = vsel %vm454, %v433, 0
        %v459 = vsel %vm454, 65537, 0
        %460 = vrot.lane.b32.xlu0 %v459, 64
        %v461 = vpop.permute.xlu0 %460
        %v462 = vunpack.c.l.b16 %v461
        %v463 = vunpack.c.h.b16 %v461
        %v464 = vunpack.c.l.b16 0
        %v465 = vunpack.c.h.b16 0
        %vm466 = vcmp.ne.s32.totalorder %v462, %v464
        %vm467 = vcmp.ne.s32.totalorder %v463, %v465
        %vm468 = vmpackc.low %vm467, %vm466
        %v469 = vsel %vm468, %v430, 0
        %v470 = vsel %vm468, %v431, 0
        %v471 = vsel %vm468, %v432, 0
        %v472 = vsel %vm468, %v433, 0
        %v474 = vunpack.c.l.b16 %v430
        %v475 = vpack.c.b16 %v474, %v474
        %476 = vrot.lane.b32.xlu0 %v475, 96
        %v477 = vpop.permute.xlu0 %476
        %v479 = vsel %vm287, %v455, 0
        %v482 = vsel %vm287, %v477, 0
        %484 = vmatpush.bf16.xpose.msra.mxu0 0
        %485 = vmatpush.bf16.xpose.msra.mxu0 0
        %486 = vmatpush.bf16.xpose.msra.mxu0 0
        %487 = vmatpush.bf16.xpose.msra.mxu0 0
        %488 = vmatpush.bf16.xpose.msra.mxu0 0
        %489 = vmatpush.bf16.xpose.msra.mxu0 0
        %490 = vmatpush.bf16.xpose.msra.mxu0 0
        %491 = vmatpush.bf16.xpose.msra.mxu0 %v482
        %492 = vmatmul.bf16.gmra.mxu0 %v479
        %v493 = vpop.f32.mrf.mxu0
        %v494 = vadd.f32 %v439, %v493
        %v495 = vpop.f32.mrf.mxu0
        %496 = vdwg.mxu0
        %v498 = vunpack.c.l.b16 %v431
        %v499 = vpack.c.b16 %v498, %v498
        %500 = vrot.lane.b32.xlu0 %v499, 96
        %v501 = vpop.permute.xlu0 %500
        %v503 = vsel %vm287, %v456, 0
        %v506 = vsel %vm287, %v501, 0
        %508 = vmatpush.bf16.xpose.msra.mxu0 0
        %509 = vmatpush.bf16.xpose.msra.mxu0 0
        %510 = vmatpush.bf16.xpose.msra.mxu0 0
        %511 = vmatpush.bf16.xpose.msra.mxu0 0
        %512 = vmatpush.bf16.xpose.msra.mxu0 0
        %513 = vmatpush.bf16.xpose.msra.mxu0 0
        %514 = vmatpush.bf16.xpose.msra.mxu0 0
        %515 = vmatpush.bf16.xpose.msra.mxu0 %v506
        %516 = vmatmul.bf16.gmra.mxu0 %v503
        %v517 = vpop.f32.mrf.mxu0
        %v518 = vadd.f32 %v439, %v517
        %v519 = vpop.f32.mrf.mxu0
        %520 = vdwg.mxu0
        %v522 = vunpack.c.l.b16 %v432
        %v523 = vpack.c.b16 %v522, %v522
        %524 = vrot.lane.b32.xlu0 %v523, 96
        %v525 = vpop.permute.xlu0 %524
        %v527 = vsel %vm287, %v457, 0
        %v530 = vsel %vm287, %v525, 0
        %532 = vmatpush.bf16.xpose.msra.mxu0 0
        %533 = vmatpush.bf16.xpose.msra.mxu0 0
        %534 = vmatpush.bf16.xpose.msra.mxu0 0
        %535 = vmatpush.bf16.xpose.msra.mxu0 0
        %536 = vmatpush.bf16.xpose.msra.mxu0 0
        %537 = vmatpush.bf16.xpose.msra.mxu0 0
        %538 = vmatpush.bf16.xpose.msra.mxu0 0
        %539 = vmatpush.bf16.xpose.msra.mxu0 %v530
        %540 = vmatmul.bf16.gmra.mxu0 %v527
        %v541 = vpop.f32.mrf.mxu0
        %v542 = vadd.f32 %v439, %v541
        %v543 = vpop.f32.mrf.mxu0
        %544 = vdwg.mxu0
        %v546 = vunpack.c.l.b16 %v433
        %v547 = vpack.c.b16 %v546, %v546
        %548 = vrot.lane.b32.xlu0 %v547, 96
        %v549 = vpop.permute.xlu0 %548
        %v551 = vsel %vm287, %v458, 0
        %v554 = vsel %vm287, %v549, 0
        %556 = vmatpush.bf16.xpose.msra.mxu0 0
        %557 = vmatpush.bf16.xpose.msra.mxu0 0
        %558 = vmatpush.bf16.xpose.msra.mxu0 0
        %559 = vmatpush.bf16.xpose.msra.mxu0 0
        %560 = vmatpush.bf16.xpose.msra.mxu0 0
        %561 = vmatpush.bf16.xpose.msra.mxu0 0
        %562 = vmatpush.bf16.xpose.msra.mxu0 0
        %563 = vmatpush.bf16.xpose.msra.mxu0 %v554
        %564 = vmatmul.bf16.gmra.mxu0 %v551
        %v565 = vpop.f32.mrf.mxu0
        %v566 = vadd.f32 %v439, %v565
        %v567 = vpop.f32.mrf.mxu0
        %568 = vdwg.mxu0
        %vm569 = vcmask 64512
        %v570 = vsel %vm569, %v494, -inf
        %571 = vmax.xlane.f32.xlu0 %v570
        %v572 = vpop.xlane.xlu0 %571
        %v573 = vsel %vm569, %v518, -inf
        %574 = vmax.xlane.f32.xlu0 %v573
        %v575 = vpop.xlane.xlu0 %574
        %v576 = vsel %vm569, %v542, -inf
        %577 = vmax.xlane.f32.xlu0 %v576
        %v578 = vpop.xlane.xlu0 %577
        %v579 = vsel %vm569, %v566, -inf
        %580 = vmax.xlane.f32.xlu0 %v579
        %v581 = vpop.xlane.xlu0 %580
        %v582 = vsub.f32 %v494, %v572
        %v583 = vsub.f32 %v518, %v575
        %v584 = vsub.f32 %v542, %v578
        %v585 = vsub.f32 %v566, %v581
        %v586 = vmul.f32 %v582, 1.442695
        %v587 = vpow.pop %v586
        %v588 = vmul.f32 %v583, 1.442695
        %v589 = vpow.pop %v588
        %v590 = vmul.f32 %v584, 1.442695
        %v591 = vpow.pop %v590
        %v592 = vmul.f32 %v585, 1.442695
        %v593 = vpow.pop %v592
        %v594 = vsel %vm569, %v587, 0.0
        %595 = vadd.xlane.f32.xlu0 %v594
        %v596 = vpop.xlane.xlu0 %595
        %v597 = vsel %vm569, %v589, 0.0
        %598 = vadd.xlane.f32.xlu0 %v597
        %v599 = vpop.xlane.xlu0 %598
        %v600 = vsel %vm569, %v591, 0.0
        %601 = vadd.xlane.f32.xlu0 %v600
        %v602 = vpop.xlane.xlu0 %601
        %v603 = vsel %vm569, %v593, 0.0
        %604 = vadd.xlane.f32.xlu0 %v603
        %v605 = vpop.xlane.xlu0 %604
        %v606 = vrcp.pop %v596
        %v607 = vrcp.pop %v599
        %v608 = vrcp.pop %v602
        %v609 = vrcp.pop %v605
        %v610 = vmul.f32 %v587, %v606
        %v611 = vmul.f32 %v589, %v607
        %v612 = vmul.f32 %v591, %v608
        %v613 = vmul.f32 %v593, %v609
        %v614 = vpack.c.bf16 %v610, %v610
        %v615 = vpack.c.bf16 %v611, %v611
        %v616 = vpack.c.bf16 %v612, %v612
        %v617 = vpack.c.bf16 %v613, %v613
        %v618 = vsel %vm445, 1, 0
        %vm619 = vcmp.eq.s32.totalorder %v618, 1
        %vm620 = vmpackc.low %vm619, %vm619
        %v621 = vsel %vm620, %v430, 0
        %v622 = vsel %vm620, %v431, 0
        %v623 = vsel %vm620, %v432, 0
        %v624 = vsel %vm620, %v433, 0
        %v625 = vsel %vm620, 65537, 0
        %626 = vrot.lane.b32.xlu0 %v625, 64
        %v627 = vpop.permute.xlu0 %626
        %v628 = vunpack.c.l.b16 %v627
        %v629 = vunpack.c.h.b16 %v627
        %v630 = vunpack.c.l.b16 0
        %v631 = vunpack.c.h.b16 0
        %vm632 = vcmp.ne.s32.totalorder %v628, %v630
        %vm633 = vcmp.ne.s32.totalorder %v629, %v631
        %vm634 = vmpackc.low %vm633, %vm632
        %v635 = vsel %vm634, %v430, 0
        %v636 = vsel %vm634, %v431, 0
        %v637 = vsel %vm634, %v432, 0
        %v638 = vsel %vm634, %v433, 0
        %v640 = vsel %vm287, %v621, 0
        %642 = vmatpush.bf16.xpose.msra.mxu0 0
        %643 = vmatpush.bf16.xpose.msra.mxu0 0
        %644 = vmatpush.bf16.xpose.msra.mxu0 0
        %645 = vmatpush.bf16.xpose.msra.mxu0 0
        %646 = vmatpush.bf16.xpose.msra.mxu0 0
        %647 = vmatpush.bf16.xpose.msra.mxu0 0
        %648 = vmatpush.bf16.xpose.msra.mxu0 0
        %649 = vmatpush.bf16.xpose.msra.mxu0 %v482
        %650 = vmatmul.bf16.gmra.mxu0 %v640
        %v651 = vpop.f32.mrf.mxu0
        %v652 = vadd.f32 %v439, %v651
        %v653 = vpop.f32.mrf.mxu0
        %654 = vdwg.mxu0
        %v656 = vsel %vm287, %v622, 0
        %658 = vmatpush.bf16.xpose.msra.mxu0 0
        %659 = vmatpush.bf16.xpose.msra.mxu0 0
        %660 = vmatpush.bf16.xpose.msra.mxu0 0
        %661 = vmatpush.bf16.xpose.msra.mxu0 0
        %662 = vmatpush.bf16.xpose.msra.mxu0 0
        %663 = vmatpush.bf16.xpose.msra.mxu0 0
        %664 = vmatpush.bf16.xpose.msra.mxu0 0
        %665 = vmatpush.bf16.xpose.msra.mxu0 %v506
        %666 = vmatmul.bf16.gmra.mxu0 %v656
        %v667 = vpop.f32.mrf.mxu0
        %v668 = vadd.f32 %v439, %v667
        %v669 = vpop.f32.mrf.mxu0
        %670 = vdwg.mxu0
        %v672 = vsel %vm287, %v623, 0
        %674 = vmatpush.bf16.xpose.msra.mxu0 0
        %675 = vmatpush.bf16.xpose.msra.mxu0 0
        %676 = vmatpush.bf16.xpose.msra.mxu0 0
        %677 = vmatpush.bf16.xpose.msra.mxu0 0
        %678 = vmatpush.bf16.xpose.msra.mxu0 0
        %679 = vmatpush.bf16.xpose.msra.mxu0 0
        %680 = vmatpush.bf16.xpose.msra.mxu0 0
        %681 = vmatpush.bf16.xpose.msra.mxu0 %v530
        %682 = vmatmul.bf16.gmra.mxu0 %v672
        %v683 = vpop.f32.mrf.mxu0
        %v684 = vadd.f32 %v439, %v683
        %v685 = vpop.f32.mrf.mxu0
        %686 = vdwg.mxu0
        %v688 = vsel %vm287, %v624, 0
        %690 = vmatpush.bf16.xpose.msra.mxu0 0
        %691 = vmatpush.bf16.xpose.msra.mxu0 0
        %692 = vmatpush.bf16.xpose.msra.mxu0 0
        %693 = vmatpush.bf16.xpose.msra.mxu0 0
        %694 = vmatpush.bf16.xpose.msra.mxu0 0
        %695 = vmatpush.bf16.xpose.msra.mxu0 0
        %696 = vmatpush.bf16.xpose.msra.mxu0 0
        %697 = vmatpush.bf16.xpose.msra.mxu0 %v554
        %698 = vmatmul.bf16.gmra.mxu0 %v688
        %v699 = vpop.f32.mrf.mxu0
        %v700 = vadd.f32 %v439, %v699
        %v701 = vpop.f32.mrf.mxu0
        %702 = vdwg.mxu0
        %v703 = vsel %vm569, %v652, -inf
        %704 = vmax.xlane.f32.xlu0 %v703
        %v705 = vpop.xlane.xlu0 %704
        %v706 = vsel %vm569, %v668, -inf
        %707 = vmax.xlane.f32.xlu0 %v706
        %v708 = vpop.xlane.xlu0 %707
        %v709 = vsel %vm569, %v684, -inf
        %710 = vmax.xlane.f32.xlu0 %v709
        %v711 = vpop.xlane.xlu0 %710
        %v712 = vsel %vm569, %v700, -inf
        %713 = vmax.xlane.f32.xlu0 %v712
        %v714 = vpop.xlane.xlu0 %713
        %v715 = vsub.f32 %v652, %v705
        %v716 = vsub.f32 %v668, %v708
        %v717 = vsub.f32 %v684, %v711
        %v718 = vsub.f32 %v700, %v714
        %v719 = vmul.f32 %v715, 1.442695
        %v720 = vpow.pop %v719
        %v721 = vmul.f32 %v716, 1.442695
        %v722 = vpow.pop %v721
        %v723 = vmul.f32 %v717, 1.442695
        %v724 = vpow.pop %v723
        %v725 = vmul.f32 %v718, 1.442695
        %v726 = vpow.pop %v725
        %v727 = vsel %vm569, %v720, 0.0
        %728 = vadd.xlane.f32.xlu0 %v727
        %v729 = vpop.xlane.xlu0 %728
        %v730 = vsel %vm569, %v722, 0.0
        %731 = vadd.xlane.f32.xlu0 %v730
        %v732 = vpop.xlane.xlu0 %731
        %v733 = vsel %vm569, %v724, 0.0
        %734 = vadd.xlane.f32.xlu0 %v733
        %v735 = vpop.xlane.xlu0 %734
        %v736 = vsel %vm569, %v726, 0.0
        %737 = vadd.xlane.f32.xlu0 %v736
        %v738 = vpop.xlane.xlu0 %737
        %v739 = vrcp.pop %v729
        %v740 = vrcp.pop %v732
        %v741 = vrcp.pop %v735
        %v742 = vrcp.pop %v738
        %v743 = vmul.f32 %v720, %v739
        %v744 = vmul.f32 %v722, %v740
        %v745 = vmul.f32 %v724, %v741
        %v746 = vmul.f32 %v726, %v742
        %v747 = vpack.c.bf16 %v743, %v743
        %v748 = vpack.c.bf16 %v744, %v744
        %v749 = vpack.c.bf16 %v745, %v745
        %v750 = vpack.c.bf16 %v746, %v746
        %v752 = vunpack.c.l.b16 %v635
        %v753 = vpack.c.b16 %v752, %v752
        %754 = vrot.lane.b32.xlu0 %v753, 64
        %v755 = vpop.permute.xlu0 %754
        %v757 = vsel %vm569, %v747, 0
        %vm759 = vcmask 1043456
        %v761 = vsel %vm759, %v755, 0
        %763 = vmatpush.bf16.msra.mxu0 0
        %764 = vmatpush.bf16.msra.mxu0 0
        %765 = vmatpush.bf16.msra.mxu0 0
        %766 = vmatpush.bf16.msra.mxu0 0
        %767 = vmatpush.bf16.msra.mxu0 0
        %768 = vmatpush.bf16.msra.mxu0 0
        %769 = vmatpush.bf16.msra.mxu0 0
        %770 = vmatpush.bf16.msra.mxu0 %v761
        %771 = vmatmul.bf16.gmra.mxu0 %v757
        %v772 = vpop.f32.mrf.mxu0
        %v773 = vadd.f32 0.0, %v772
        %v774 = vpop.f32.mrf.mxu0
        %775 = vdwg.mxu0
        %v777 = vunpack.c.l.b16 %v636
        %v778 = vpack.c.b16 %v777, %v777
        %779 = vrot.lane.b32.xlu0 %v778, 64
        %v780 = vpop.permute.xlu0 %779
        %v782 = vsel %vm569, %v748, 0
        %v785 = vsel %vm759, %v780, 0
        %787 = vmatpush.bf16.msra.mxu0 0
        %788 = vmatpush.bf16.msra.mxu0 0
        %789 = vmatpush.bf16.msra.mxu0 0
        %790 = vmatpush.bf16.msra.mxu0 0
        %791 = vmatpush.bf16.msra.mxu0 0
        %792 = vmatpush.bf16.msra.mxu0 0
        %793 = vmatpush.bf16.msra.mxu0 0
        %794 = vmatpush.bf16.msra.mxu0 %v785
        %795 = vmatmul.bf16.gmra.mxu0 %v782
        %v796 = vpop.f32.mrf.mxu0
        %v797 = vadd.f32 0.0, %v796
        %v798 = vpop.f32.mrf.mxu0
        %799 = vdwg.mxu0
        %v801 = vunpack.c.l.b16 %v637
        %v802 = vpack.c.b16 %v801, %v801
        %803 = vrot.lane.b32.xlu0 %v802, 64
        %v804 = vpop.permute.xlu0 %803
        %v806 = vsel %vm569, %v749, 0
        %v809 = vsel %vm759, %v804, 0
        %811 = vmatpush.bf16.msra.mxu0 0
        %812 = vmatpush.bf16.msra.mxu0 0
        %813 = vmatpush.bf16.msra.mxu0 0
        %814 = vmatpush.bf16.msra.mxu0 0
        %815 = vmatpush.bf16.msra.mxu0 0
        %816 = vmatpush.bf16.msra.mxu0 0
        %817 = vmatpush.bf16.msra.mxu0 0
        %818 = vmatpush.bf16.msra.mxu0 %v809
        %819 = vmatmul.bf16.gmra.mxu0 %v806
        %v820 = vpop.f32.mrf.mxu0
        %v821 = vadd.f32 0.0, %v820
        %v822 = vpop.f32.mrf.mxu0
        %823 = vdwg.mxu0
        %v825 = vunpack.c.l.b16 %v638
        %v826 = vpack.c.b16 %v825, %v825
        %827 = vrot.lane.b32.xlu0 %v826, 64
        %v828 = vpop.permute.xlu0 %827
        %v830 = vsel %vm569, %v750, 0
        %v833 = vsel %vm759, %v828, 0
        %835 = vmatpush.bf16.msra.mxu0 0
        %836 = vmatpush.bf16.msra.mxu0 0
        %837 = vmatpush.bf16.msra.mxu0 0
        %838 = vmatpush.bf16.msra.mxu0 0
        %839 = vmatpush.bf16.msra.mxu0 0
        %840 = vmatpush.bf16.msra.mxu0 0
        %841 = vmatpush.bf16.msra.mxu0 0
        %842 = vmatpush.bf16.msra.mxu0 %v833
        %843 = vmatmul.bf16.gmra.mxu0 %v830
        %v844 = vpop.f32.mrf.mxu0
        %v845 = vadd.f32 0.0, %v844
        %v846 = vpop.f32.mrf.mxu0
        %847 = vdwg.mxu0
        %v849 = vunpack.c.l.b16 %v469
        %v850 = vpack.c.b16 %v849, %v849
        %851 = vrot.lane.b32.xlu0 %v850, 64
        %v852 = vpop.permute.xlu0 %851
        %v854 = vsel %vm569, %v614, 0
        %v857 = vsel %vm759, %v852, 0
        %859 = vmatpush.bf16.msra.mxu0 0
        %860 = vmatpush.bf16.msra.mxu0 0
        %861 = vmatpush.bf16.msra.mxu0 0
        %862 = vmatpush.bf16.msra.mxu0 0
        %863 = vmatpush.bf16.msra.mxu0 0
        %864 = vmatpush.bf16.msra.mxu0 0
        %865 = vmatpush.bf16.msra.mxu0 0
        %866 = vmatpush.bf16.msra.mxu0 %v857
        %867 = vmatmul.bf16.gmra.mxu0 %v854
        %v868 = vpop.f32.mrf.mxu0
        %v869 = vadd.f32 %v773, %v868
        %v870 = vpop.f32.mrf.mxu0
        %871 = vdwg.mxu0
        %v873 = vunpack.c.l.b16 %v470
        %v874 = vpack.c.b16 %v873, %v873
        %875 = vrot.lane.b32.xlu0 %v874, 64
        %v876 = vpop.permute.xlu0 %875
        %v878 = vsel %vm569, %v615, 0
        %v881 = vsel %vm759, %v876, 0
        %883 = vmatpush.bf16.msra.mxu0 0
        %884 = vmatpush.bf16.msra.mxu0 0
        %885 = vmatpush.bf16.msra.mxu0 0
        %886 = vmatpush.bf16.msra.mxu0 0
        %887 = vmatpush.bf16.msra.mxu0 0
        %888 = vmatpush.bf16.msra.mxu0 0
        %889 = vmatpush.bf16.msra.mxu0 0
        %890 = vmatpush.bf16.msra.mxu0 %v881
        %891 = vmatmul.bf16.gmra.mxu0 %v878
        %v892 = vpop.f32.mrf.mxu0
        %v893 = vadd.f32 %v797, %v892
        %v894 = vpop.f32.mrf.mxu0
        %895 = vdwg.mxu0
        %v897 = vunpack.c.l.b16 %v471
        %v898 = vpack.c.b16 %v897, %v897
        %899 = vrot.lane.b32.xlu0 %v898, 64
        %v900 = vpop.permute.xlu0 %899
        %v902 = vsel %vm569, %v616, 0
        %v905 = vsel %vm759, %v900, 0
        %907 = vmatpush.bf16.msra.mxu0 0
        %908 = vmatpush.bf16.msra.mxu0 0
        %909 = vmatpush.bf16.msra.mxu0 0
        %910 = vmatpush.bf16.msra.mxu0 0
        %911 = vmatpush.bf16.msra.mxu0 0
        %912 = vmatpush.bf16.msra.mxu0 0
        %913 = vmatpush.bf16.msra.mxu0 0
        %914 = vmatpush.bf16.msra.mxu0 %v905
        %915 = vmatmul.bf16.gmra.mxu0 %v902
        %v916 = vpop.f32.mrf.mxu0
        %v917 = vadd.f32 %v821, %v916
        %v918 = vpop.f32.mrf.mxu0
        %919 = vdwg.mxu0
        %v921 = vunpack.c.l.b16 %v472
        %v922 = vpack.c.b16 %v921, %v921
        %923 = vrot.lane.b32.xlu0 %v922, 64
        %v924 = vpop.permute.xlu0 %923
        %v926 = vsel %vm569, %v617, 0
        %v929 = vsel %vm759, %v924, 0
        %931 = vmatpush.bf16.msra.mxu0 0
        %932 = vmatpush.bf16.msra.mxu0 0
        %933 = vmatpush.bf16.msra.mxu0 0
        %934 = vmatpush.bf16.msra.mxu0 0
        %935 = vmatpush.bf16.msra.mxu0 0
        %936 = vmatpush.bf16.msra.mxu0 0
        %937 = vmatpush.bf16.msra.mxu0 0
        %938 = vmatpush.bf16.msra.mxu0 %v929
        %939 = vmatmul.bf16.gmra.mxu0 %v926
        %v940 = vpop.f32.mrf.mxu0
        %v941 = vadd.f32 %v845, %v940
        %v942 = vpop.f32.mrf.mxu0
        %943 = vdwg.mxu0
        %v944 = vsel %vm448, 1, 0
        %vm945 = vcmp.eq.s32.totalorder %v944, 1
        %vm946 = vmpackc.low %vm945, %vm945
        %v947 = vsel %vm946, %v430, 0
        %v948 = vsel %vm946, %v431, 0
        %v949 = vsel %vm946, %v432, 0
        %v950 = vsel %vm946, %v433, 0
        %v951 = vsel %vm946, 65537, 0
        %952 = vrot.lane.b32.xlu0 %v951, 64
        %v953 = vpop.permute.xlu0 %952
        %v954 = vunpack.c.l.b16 %v953
        %v955 = vunpack.c.h.b16 %v953
        %v956 = vunpack.c.l.b16 0
        %v957 = vunpack.c.h.b16 0
        %vm958 = vcmp.ne.s32.totalorder %v954, %v956
        %vm959 = vcmp.ne.s32.totalorder %v955, %v957
        %vm960 = vmpackc.low %vm959, %vm958
        %v961 = vsel %vm960, %v430, 0
        %v962 = vsel %vm960, %v431, 0
        %v963 = vsel %vm960, %v432, 0
        %v964 = vsel %vm960, %v433, 0
        %v966 = vsel %vm287, %v947, 0
        %968 = vmatpush.bf16.xpose.msra.mxu0 0
        %969 = vmatpush.bf16.xpose.msra.mxu0 0
        %970 = vmatpush.bf16.xpose.msra.mxu0 0
        %971 = vmatpush.bf16.xpose.msra.mxu0 0
        %972 = vmatpush.bf16.xpose.msra.mxu0 0
        %973 = vmatpush.bf16.xpose.msra.mxu0 0
        %974 = vmatpush.bf16.xpose.msra.mxu0 0
        %975 = vmatpush.bf16.xpose.msra.mxu0 %v482
        %976 = vmatmul.bf16.gmra.mxu0 %v966
        %v977 = vpop.f32.mrf.mxu0
        %v978 = vadd.f32 %v439, %v977
        %v979 = vpop.f32.mrf.mxu0
        %980 = vdwg.mxu0
        %v982 = vsel %vm287, %v948, 0
        %984 = vmatpush.bf16.xpose.msra.mxu0 0
        %985 = vmatpush.bf16.xpose.msra.mxu0 0
        %986 = vmatpush.bf16.xpose.msra.mxu0 0
        %987 = vmatpush.bf16.xpose.msra.mxu0 0
        %988 = vmatpush.bf16.xpose.msra.mxu0 0
        %989 = vmatpush.bf16.xpose.msra.mxu0 0
        %990 = vmatpush.bf16.xpose.msra.mxu0 0
        %991 = vmatpush.bf16.xpose.msra.mxu0 %v506
        %992 = vmatmul.bf16.gmra.mxu0 %v982
        %v993 = vpop.f32.mrf.mxu0
        %v994 = vadd.f32 %v439, %v993
        %v995 = vpop.f32.mrf.mxu0
        %996 = vdwg.mxu0
        %v998 = vsel %vm287, %v949, 0
        %1000 = vmatpush.bf16.xpose.msra.mxu0 0
        %1001 = vmatpush.bf16.xpose.msra.mxu0 0
        %1002 = vmatpush.bf16.xpose.msra.mxu0 0
        %1003 = vmatpush.bf16.xpose.msra.mxu0 0
        %1004 = vmatpush.bf16.xpose.msra.mxu0 0
        %1005 = vmatpush.bf16.xpose.msra.mxu0 0
        %1006 = vmatpush.bf16.xpose.msra.mxu0 0
        %1007 = vmatpush.bf16.xpose.msra.mxu0 %v530
        %1008 = vmatmul.bf16.gmra.mxu0 %v998
        %v1009 = vpop.f32.mrf.mxu0
        %v1010 = vadd.f32 %v439, %v1009
        %v1011 = vpop.f32.mrf.mxu0
        %1012 = vdwg.mxu0
        %v1014 = vsel %vm287, %v950, 0
        %1016 = vmatpush.bf16.xpose.msra.mxu0 0
        %1017 = vmatpush.bf16.xpose.msra.mxu0 0
        %1018 = vmatpush.bf16.xpose.msra.mxu0 0
        %1019 = vmatpush.bf16.xpose.msra.mxu0 0
        %1020 = vmatpush.bf16.xpose.msra.mxu0 0
        %1021 = vmatpush.bf16.xpose.msra.mxu0 0
        %1022 = vmatpush.bf16.xpose.msra.mxu0 0
        %1023 = vmatpush.bf16.xpose.msra.mxu0 %v554
        %1024 = vmatmul.bf16.gmra.mxu0 %v1014
        %v1025 = vpop.f32.mrf.mxu0
        %v1026 = vadd.f32 %v439, %v1025
        %v1027 = vpop.f32.mrf.mxu0
        %1028 = vdwg.mxu0
        %v1029 = vsel %vm569, %v978, -inf
        %1030 = vmax.xlane.f32.xlu0 %v1029
        %v1031 = vpop.xlane.xlu0 %1030
        %v1032 = vsel %vm569, %v994, -inf
        %1033 = vmax.xlane.f32.xlu0 %v1032
        %v1034 = vpop.xlane.xlu0 %1033
        %v1035 = vsel %vm569, %v1010, -inf
        %1036 = vmax.xlane.f32.xlu0 %v1035
        %v1037 = vpop.xlane.xlu0 %1036
        %v1038 = vsel %vm569, %v1026, -inf
        %1039 = vmax.xlane.f32.xlu0 %v1038
        %v1040 = vpop.xlane.xlu0 %1039
        %v1041 = vsub.f32 %v978, %v1031
        %v1042 = vsub.f32 %v994, %v1034
        %v1043 = vsub.f32 %v1010, %v1037
        %v1044 = vsub.f32 %v1026, %v1040
        %v1045 = vmul.f32 %v1041, 1.442695
        %v1046 = vpow.pop %v1045
        %v1047 = vmul.f32 %v1042, 1.442695
        %v1048 = vpow.pop %v1047
        %v1049 = vmul.f32 %v1043, 1.442695
        %v1050 = vpow.pop %v1049
        %v1051 = vmul.f32 %v1044, 1.442695
        %v1052 = vpow.pop %v1051
        %v1053 = vsel %vm569, %v1046, 0.0
        %1054 = vadd.xlane.f32.xlu0 %v1053
        %v1055 = vpop.xlane.xlu0 %1054
        %v1056 = vsel %vm569, %v1048, 0.0
        %1057 = vadd.xlane.f32.xlu0 %v1056
        %v1058 = vpop.xlane.xlu0 %1057
        %v1059 = vsel %vm569, %v1050, 0.0
        %1060 = vadd.xlane.f32.xlu0 %v1059
        %v1061 = vpop.xlane.xlu0 %1060
        %v1062 = vsel %vm569, %v1052, 0.0
        %1063 = vadd.xlane.f32.xlu0 %v1062
        %v1064 = vpop.xlane.xlu0 %1063
        %v1065 = vrcp.pop %v1055
        %v1066 = vrcp.pop %v1058
        %v1067 = vrcp.pop %v1061
        %v1068 = vrcp.pop %v1064
        %v1069 = vmul.f32 %v1046, %v1065
        %v1070 = vmul.f32 %v1048, %v1066
        %v1071 = vmul.f32 %v1050, %v1067
        %v1072 = vmul.f32 %v1052, %v1068
        %v1073 = vpack.c.bf16 %v1069, %v1069
        %v1074 = vpack.c.bf16 %v1070, %v1070
        %v1075 = vpack.c.bf16 %v1071, %v1071
        %v1076 = vpack.c.bf16 %v1072, %v1072
        %v1078 = vunpack.c.l.b16 %v961
        %v1079 = vpack.c.b16 %v1078, %v1078
        %1080 = vrot.lane.b32.xlu0 %v1079, 64
        %v1081 = vpop.permute.xlu0 %1080
        %v1083 = vsel %vm569, %v1073, 0
        %v1086 = vsel %vm759, %v1081, 0
        %1088 = vmatpush.bf16.msra.mxu0 0
        %1089 = vmatpush.bf16.msra.mxu0 0
        %1090 = vmatpush.bf16.msra.mxu0 0
        %1091 = vmatpush.bf16.msra.mxu0 0
        %1092 = vmatpush.bf16.msra.mxu0 0
        %1093 = vmatpush.bf16.msra.mxu0 0
        %1094 = vmatpush.bf16.msra.mxu0 0
        %1095 = vmatpush.bf16.msra.mxu0 %v1086
        %1096 = vmatmul.bf16.gmra.mxu0 %v1083
        %v1097 = vpop.f32.mrf.mxu0
        %v1098 = vadd.f32 0.0, %v1097
        %v1099 = vpop.f32.mrf.mxu0
        %1100 = vdwg.mxu0
        %v1102 = vunpack.c.l.b16 %v962
        %v1103 = vpack.c.b16 %v1102, %v1102
        %1104 = vrot.lane.b32.xlu0 %v1103, 64
        %v1105 = vpop.permute.xlu0 %1104
        %v1107 = vsel %vm569, %v1074, 0
        %v1110 = vsel %vm759, %v1105, 0
        %1112 = vmatpush.bf16.msra.mxu0 0
        %1113 = vmatpush.bf16.msra.mxu0 0
        %1114 = vmatpush.bf16.msra.mxu0 0
        %1115 = vmatpush.bf16.msra.mxu0 0
        %1116 = vmatpush.bf16.msra.mxu0 0
        %1117 = vmatpush.bf16.msra.mxu0 0
        %1118 = vmatpush.bf16.msra.mxu0 0
        %1119 = vmatpush.bf16.msra.mxu0 %v1110
        %1120 = vmatmul.bf16.gmra.mxu0 %v1107
        %v1121 = vpop.f32.mrf.mxu0
        %v1122 = vadd.f32 0.0, %v1121
        %v1123 = vpop.f32.mrf.mxu0
        %1124 = vdwg.mxu0
        %v1126 = vunpack.c.l.b16 %v963
        %v1127 = vpack.c.b16 %v1126, %v1126
        %1128 = vrot.lane.b32.xlu0 %v1127, 64
        %v1129 = vpop.permute.xlu0 %1128
        %v1131 = vsel %vm569, %v1075, 0
        %v1134 = vsel %vm759, %v1129, 0
        %1136 = vmatpush.bf16.msra.mxu0 0
        %1137 = vmatpush.bf16.msra.mxu0 0
        %1138 = vmatpush.bf16.msra.mxu0 0
        %1139 = vmatpush.bf16.msra.mxu0 0
        %1140 = vmatpush.bf16.msra.mxu0 0
        %1141 = vmatpush.bf16.msra.mxu0 0
        %1142 = vmatpush.bf16.msra.mxu0 0
        %1143 = vmatpush.bf16.msra.mxu0 %v1134
        %1144 = vmatmul.bf16.gmra.mxu0 %v1131
        %v1145 = vpop.f32.mrf.mxu0
        %v1146 = vadd.f32 0.0, %v1145
        %v1147 = vpop.f32.mrf.mxu0
        %1148 = vdwg.mxu0
        %v1150 = vunpack.c.l.b16 %v964
        %v1151 = vpack.c.b16 %v1150, %v1150
        %1152 = vrot.lane.b32.xlu0 %v1151, 64
        %v1153 = vpop.permute.xlu0 %1152
        %v1155 = vsel %vm569, %v1076, 0
        %v1158 = vsel %vm759, %v1153, 0
        %1160 = vmatpush.bf16.msra.mxu0 0
        %1161 = vmatpush.bf16.msra.mxu0 0
        %1162 = vmatpush.bf16.msra.mxu0 0
        %1163 = vmatpush.bf16.msra.mxu0 0
        %1164 = vmatpush.bf16.msra.mxu0 0
        %1165 = vmatpush.bf16.msra.mxu0 0
        %1166 = vmatpush.bf16.msra.mxu0 0
        %1167 = vmatpush.bf16.msra.mxu0 %v1158
        %1168 = vmatmul.bf16.gmra.mxu0 %v1155
        %v1169 = vpop.f32.mrf.mxu0
        %v1170 = vadd.f32 0.0, %v1169
        %v1171 = vpop.f32.mrf.mxu0
        %1172 = vdwg.mxu0
        %v1173 = vadd.f32 %v869, %v1098
        %v1174 = vadd.f32 %v893, %v1122
        %v1175 = vadd.f32 %v917, %v1146
        %v1176 = vadd.f32 %v941, %v1170
        %v1177 = vsel %vm451, 1, 0
        %vm1178 = vcmp.eq.s32.totalorder %v1177, 1
        %vm1179 = vmpackc.low %vm1178, %vm1178
        %v1180 = vsel %vm1179, %v430, 0
        %v1181 = vsel %vm1179, %v431, 0
        %v1182 = vsel %vm1179, %v432, 0
        %v1183 = vsel %vm1179, %v433, 0
        %v1184 = vsel %vm1179, 65537, 0
        %1185 = vrot.lane.b32.xlu0 %v1184, 64
        %v1186 = vpop.permute.xlu0 %1185
        %v1187 = vunpack.c.l.b16 %v1186
        %v1188 = vunpack.c.h.b16 %v1186
        %v1189 = vunpack.c.l.b16 0
        %v1190 = vunpack.c.h.b16 0
        %vm1191 = vcmp.ne.s32.totalorder %v1187, %v1189
        %vm1192 = vcmp.ne.s32.totalorder %v1188, %v1190
        %vm1193 = vmpackc.low %vm1192, %vm1191
        %v1194 = vsel %vm1193, %v430, 0
        %v1195 = vsel %vm1193, %v431, 0
        %v1196 = vsel %vm1193, %v432, 0
        %v1197 = vsel %vm1193, %v433, 0
        %v1199 = vsel %vm287, %v1180, 0
        %1201 = vmatpush.bf16.xpose.msra.mxu0 0
        %1202 = vmatpush.bf16.xpose.msra.mxu0 0
        %1203 = vmatpush.bf16.xpose.msra.mxu0 0
        %1204 = vmatpush.bf16.xpose.msra.mxu0 0
        %1205 = vmatpush.bf16.xpose.msra.mxu0 0
        %1206 = vmatpush.bf16.xpose.msra.mxu0 0
        %1207 = vmatpush.bf16.xpose.msra.mxu0 0
        %1208 = vmatpush.bf16.xpose.msra.mxu0 %v482
        %1209 = vmatmul.bf16.gmra.mxu0 %v1199
        %v1210 = vpop.f32.mrf.mxu0
        %v1211 = vadd.f32 %v439, %v1210
        %v1212 = vpop.f32.mrf.mxu0
        %1213 = vdwg.mxu0
        %v1215 = vsel %vm287, %v1181, 0
        %1217 = vmatpush.bf16.xpose.msra.mxu0 0
        %1218 = vmatpush.bf16.xpose.msra.mxu0 0
        %1219 = vmatpush.bf16.xpose.msra.mxu0 0
        %1220 = vmatpush.bf16.xpose.msra.mxu0 0
        %1221 = vmatpush.bf16.xpose.msra.mxu0 0
        %1222 = vmatpush.bf16.xpose.msra.mxu0 0
        %1223 = vmatpush.bf16.xpose.msra.mxu0 0
        %1224 = vmatpush.bf16.xpose.msra.mxu0 %v506
        %1225 = vmatmul.bf16.gmra.mxu0 %v1215
        %v1226 = vpop.f32.mrf.mxu0
        %v1227 = vadd.f32 %v439, %v1226
        %v1228 = vpop.f32.mrf.mxu0
        %1229 = vdwg.mxu0
        %v1231 = vsel %vm287, %v1182, 0
        %1233 = vmatpush.bf16.xpose.msra.mxu0 0
        %1234 = vmatpush.bf16.xpose.msra.mxu0 0
        %1235 = vmatpush.bf16.xpose.msra.mxu0 0
        %1236 = vmatpush.bf16.xpose.msra.mxu0 0
        %1237 = vmatpush.bf16.xpose.msra.mxu0 0
        %1238 = vmatpush.bf16.xpose.msra.mxu0 0
        %1239 = vmatpush.bf16.xpose.msra.mxu0 0
        %1240 = vmatpush.bf16.xpose.msra.mxu0 %v530
        %1241 = vmatmul.bf16.gmra.mxu0 %v1231
        %v1242 = vpop.f32.mrf.mxu0
        %v1243 = vadd.f32 %v439, %v1242
        %v1244 = vpop.f32.mrf.mxu0
        %1245 = vdwg.mxu0
        %v1247 = vsel %vm287, %v1183, 0
        %1249 = vmatpush.bf16.xpose.msra.mxu0 0
        %1250 = vmatpush.bf16.xpose.msra.mxu0 0
        %1251 = vmatpush.bf16.xpose.msra.mxu0 0
        %1252 = vmatpush.bf16.xpose.msra.mxu0 0
        %1253 = vmatpush.bf16.xpose.msra.mxu0 0
        %1254 = vmatpush.bf16.xpose.msra.mxu0 0
        %1255 = vmatpush.bf16.xpose.msra.mxu0 0
        %1256 = vmatpush.bf16.xpose.msra.mxu0 %v554
        %1257 = vmatmul.bf16.gmra.mxu0 %v1247
        %v1258 = vpop.f32.mrf.mxu0
        %v1259 = vadd.f32 %v439, %v1258
        %v1260 = vpop.f32.mrf.mxu0
        %1261 = vdwg.mxu0
        %v1262 = vsel %vm569, %v1211, -inf
        %1263 = vmax.xlane.f32.xlu0 %v1262
        %v1264 = vpop.xlane.xlu0 %1263
        %v1265 = vsel %vm569, %v1227, -inf
        %1266 = vmax.xlane.f32.xlu0 %v1265
        %v1267 = vpop.xlane.xlu0 %1266
        %v1268 = vsel %vm569, %v1243, -inf
        %1269 = vmax.xlane.f32.xlu0 %v1268
        %v1270 = vpop.xlane.xlu0 %1269
        %v1271 = vsel %vm569, %v1259, -inf
        %1272 = vmax.xlane.f32.xlu0 %v1271
        %v1273 = vpop.xlane.xlu0 %1272
        %v1274 = vsub.f32 %v1211, %v1264
        %v1275 = vsub.f32 %v1227, %v1267
        %v1276 = vsub.f32 %v1243, %v1270
        %v1277 = vsub.f32 %v1259, %v1273
        %v1278 = vmul.f32 %v1274, 1.442695
        %v1279 = vpow.pop %v1278
        %v1280 = vmul.f32 %v1275, 1.442695
        %v1281 = vpow.pop %v1280
        %v1282 = vmul.f32 %v1276, 1.442695
        %v1283 = vpow.pop %v1282
        %v1284 = vmul.f32 %v1277, 1.442695
        %v1285 = vpow.pop %v1284
        %v1286 = vsel %vm569, %v1279, 0.0
        %1287 = vadd.xlane.f32.xlu0 %v1286
        %v1288 = vpop.xlane.xlu0 %1287
        %v1289 = vsel %vm569, %v1281, 0.0
        %1290 = vadd.xlane.f32.xlu0 %v1289
        %v1291 = vpop.xlane.xlu0 %1290
        %v1292 = vsel %vm569, %v1283, 0.0
        %1293 = vadd.xlane.f32.xlu0 %v1292
        %v1294 = vpop.xlane.xlu0 %1293
        %v1295 = vsel %vm569, %v1285, 0.0
        %1296 = vadd.xlane.f32.xlu0 %v1295
        %v1297 = vpop.xlane.xlu0 %1296
        %v1298 = vrcp.pop %v1288
        %v1299 = vrcp.pop %v1291
        %v1300 = vrcp.pop %v1294
        %v1301 = vrcp.pop %v1297
        %v1302 = vmul.f32 %v1279, %v1298
        %v1303 = vmul.f32 %v1281, %v1299
        %v1304 = vmul.f32 %v1283, %v1300
        %v1305 = vmul.f32 %v1285, %v1301
        %v1306 = vpack.c.bf16 %v1302, %v1302
        %v1307 = vpack.c.bf16 %v1303, %v1303
        %v1308 = vpack.c.bf16 %v1304, %v1304
        %v1309 = vpack.c.bf16 %v1305, %v1305
        %v1311 = vunpack.c.l.b16 %v1194
        %v1312 = vpack.c.b16 %v1311, %v1311
        %1313 = vrot.lane.b32.xlu0 %v1312, 64
        %v1314 = vpop.permute.xlu0 %1313
        %v1316 = vsel %vm569, %v1306, 0
        %v1319 = vsel %vm759, %v1314, 0
        %1321 = vmatpush.bf16.msra.mxu0 0
        %1322 = vmatpush.bf16.msra.mxu0 0
        %1323 = vmatpush.bf16.msra.mxu0 0
        %1324 = vmatpush.bf16.msra.mxu0 0
        %1325 = vmatpush.bf16.msra.mxu0 0
        %1326 = vmatpush.bf16.msra.mxu0 0
        %1327 = vmatpush.bf16.msra.mxu0 0
        %1328 = vmatpush.bf16.msra.mxu0 %v1319
        %1329 = vmatmul.bf16.gmra.mxu0 %v1316
        %v1330 = vpop.f32.mrf.mxu0
        %v1331 = vadd.f32 0.0, %v1330
        %v1332 = vpop.f32.mrf.mxu0
        %1333 = vdwg.mxu0
        %v1335 = vunpack.c.l.b16 %v1195
        %v1336 = vpack.c.b16 %v1335, %v1335
        %1337 = vrot.lane.b32.xlu0 %v1336, 64
        %v1338 = vpop.permute.xlu0 %1337
        %v1340 = vsel %vm569, %v1307, 0
        %v1343 = vsel %vm759, %v1338, 0
        %1345 = vmatpush.bf16.msra.mxu0 0
        %1346 = vmatpush.bf16.msra.mxu0 0
        %1347 = vmatpush.bf16.msra.mxu0 0
        %1348 = vmatpush.bf16.msra.mxu0 0
        %1349 = vmatpush.bf16.msra.mxu0 0
        %1350 = vmatpush.bf16.msra.mxu0 0
        %1351 = vmatpush.bf16.msra.mxu0 0
        %1352 = vmatpush.bf16.msra.mxu0 %v1343
        %1353 = vmatmul.bf16.gmra.mxu0 %v1340
        %v1354 = vpop.f32.mrf.mxu0
        %v1355 = vadd.f32 0.0, %v1354
        %v1356 = vpop.f32.mrf.mxu0
        %1357 = vdwg.mxu0
        %v1359 = vunpack.c.l.b16 %v1196
        %v1360 = vpack.c.b16 %v1359, %v1359
        %1361 = vrot.lane.b32.xlu0 %v1360, 64
        %v1362 = vpop.permute.xlu0 %1361
        %v1364 = vsel %vm569, %v1308, 0
        %v1367 = vsel %vm759, %v1362, 0
        %1369 = vmatpush.bf16.msra.mxu0 0
        %1370 = vmatpush.bf16.msra.mxu0 0
        %1371 = vmatpush.bf16.msra.mxu0 0
        %1372 = vmatpush.bf16.msra.mxu0 0
        %1373 = vmatpush.bf16.msra.mxu0 0
        %1374 = vmatpush.bf16.msra.mxu0 0
        %1375 = vmatpush.bf16.msra.mxu0 0
        %1376 = vmatpush.bf16.msra.mxu0 %v1367
        %1377 = vmatmul.bf16.gmra.mxu0 %v1364
        %v1378 = vpop.f32.mrf.mxu0
        %v1379 = vadd.f32 0.0, %v1378
        %v1380 = vpop.f32.mrf.mxu0
        %1381 = vdwg.mxu0
        %v1383 = vunpack.c.l.b16 %v1197
        %v1384 = vpack.c.b16 %v1383, %v1383
        %1385 = vrot.lane.b32.xlu0 %v1384, 64
        %v1386 = vpop.permute.xlu0 %1385
        %v1388 = vsel %vm569, %v1309, 0
        %v1391 = vsel %vm759, %v1386, 0
        %1393 = vmatpush.bf16.msra.mxu0 0
        %1394 = vmatpush.bf16.msra.mxu0 0
        %1395 = vmatpush.bf16.msra.mxu0 0
        %1396 = vmatpush.bf16.msra.mxu0 0
        %1397 = vmatpush.bf16.msra.mxu0 0
        %1398 = vmatpush.bf16.msra.mxu0 0
        %1399 = vmatpush.bf16.msra.mxu0 0
        %1400 = vmatpush.bf16.msra.mxu0 %v1391
        %1401 = vmatmul.bf16.gmra.mxu0 %v1388
        %v1402 = vpop.f32.mrf.mxu0
        %v1403 = vadd.f32 0.0, %v1402
        %v1404 = vpop.f32.mrf.mxu0
        %1405 = vdwg.mxu0
        %v1406 = vadd.f32 %v1173, %v1331
        %v1407 = vadd.f32 %v1174, %v1355
        %v1408 = vadd.f32 %v1175, %v1379
        %v1409 = vadd.f32 %v1176, %v1403
        %v1410 = vadd.f32 %v283, %v1406
        %v1411 = vadd.f32 %v284, %v1407
        %v1412 = vadd.f32 %v285, %v1408
        %v1413 = vadd.f32 %v286, %v1409
        %v1414 = vsel %vm287, %v1410, 0.0
        %1415 = vadd.xlane.f32.xlu0 %v1414
        %v1416 = vpop.xlane.xlu0 %1415
        %v1417 = vsel %vm287, %v1411, 0.0
        %1418 = vadd.xlane.f32.xlu0 %v1417
        %v1419 = vpop.xlane.xlu0 %1418
        %v1420 = vsel %vm287, %v1412, 0.0
        %1421 = vadd.xlane.f32.xlu0 %v1420
        %v1422 = vpop.xlane.xlu0 %1421
        %v1423 = vsel %vm287, %v1413, 0.0
        %1424 = vadd.xlane.f32.xlu0 %v1423
        %v1425 = vpop.xlane.xlu0 %1424
        %v1426 = vmul.f32 %v1416, %v306
        %v1427 = vmul.f32 %v1419, %v306
        %v1428 = vmul.f32 %v1422, %v306
        %v1429 = vmul.f32 %v1425, %v306
        %v1430 = vsub.f32 %v1410, %v1426
        %v1431 = vsub.f32 %v1411, %v1427
        %v1432 = vsub.f32 %v1412, %v1428
        %v1433 = vsub.f32 %v1413, %v1429
        %v1434 = vmul.f32 %v1430, %v1430
        %v1435 = vmul.f32 %v1431, %v1431
        %v1436 = vmul.f32 %v1432, %v1432
        %v1437 = vmul.f32 %v1433, %v1433
        %v1438 = vsel %vm287, %v1434, 0.0
        %1439 = vadd.xlane.f32.xlu0 %v1438
        %v1440 = vpop.xlane.xlu0 %1439
        %v1441 = vsel %vm287, %v1435, 0.0
        %1442 = vadd.xlane.f32.xlu0 %v1441
        %v1443 = vpop.xlane.xlu0 %1442
        %v1444 = vsel %vm287, %v1436, 0.0
        %1445 = vadd.xlane.f32.xlu0 %v1444
        %v1446 = vpop.xlane.xlu0 %1445
        %v1447 = vsel %vm287, %v1437, 0.0
        %1448 = vadd.xlane.f32.xlu0 %v1447
        %v1449 = vpop.xlane.xlu0 %1448
        %v1450 = vmul.f32 %v1440, %v306
        %v1451 = vmul.f32 %v1443, %v306
        %v1452 = vmul.f32 %v1446, %v306
        %v1453 = vmul.f32 %v1449, %v306
        %v1454 = vadd.f32 %v1450, 1e-05
        %v1455 = vadd.f32 %v1451, 1e-05
        %v1456 = vadd.f32 %v1452, 1e-05
        %v1457 = vadd.f32 %v1453, 1e-05
        %v1458 = vrsqrt.pop %v1454
        %v1459 = vmul.f32 %v1458, %v1454
        %v1460 = vmul.f32 %v1459, %v1458
        %v1461 = vmul.f32 0.5, %v1460
        %v1462 = vsub.f32 1.5, %v1461
        %v1463 = vmul.f32 %v1458, %v1462
        %vm1464 = vweird.f32 %v1454
        %vm1465 = vweird.f32 %v1458
        %vm1466 = vmor %vm1464, %vm1465
        %v1467 = vsel %vm1466, %v1458, %v1463
        %v1468 = vrsqrt.pop %v1455
        %v1469 = vmul.f32 %v1468, %v1455
        %v1470 = vmul.f32 %v1469, %v1468
        %v1471 = vmul.f32 0.5, %v1470
        %v1472 = vsub.f32 1.5, %v1471
        %v1473 = vmul.f32 %v1468, %v1472
        %vm1474 = vweird.f32 %v1455
        %vm1475 = vweird.f32 %v1468
        %vm1476 = vmor %vm1474, %vm1475
        %v1477 = vsel %vm1476, %v1468, %v1473
        %v1478 = vrsqrt.pop %v1456
        %v1479 = vmul.f32 %v1478, %v1456
        %v1480 = vmul.f32 %v1479, %v1478
        %v1481 = vmul.f32 0.5, %v1480
        %v1482 = vsub.f32 1.5, %v1481
        %v1483 = vmul.f32 %v1478, %v1482
        %vm1484 = vweird.f32 %v1456
        %vm1485 = vweird.f32 %v1478
        %vm1486 = vmor %vm1484, %vm1485
        %v1487 = vsel %vm1486, %v1478, %v1483
        %v1488 = vrsqrt.pop %v1457
        %v1489 = vmul.f32 %v1488, %v1457
        %v1490 = vmul.f32 %v1489, %v1488
        %v1491 = vmul.f32 0.5, %v1490
        %v1492 = vsub.f32 1.5, %v1491
        %v1493 = vmul.f32 %v1488, %v1492
        %vm1494 = vweird.f32 %v1457
        %vm1495 = vweird.f32 %v1488
        %vm1496 = vmor %vm1494, %vm1495
        %v1497 = vsel %vm1496, %v1488, %v1493
        %v1498 = vmul.f32 %v1430, %v1467
        %v1499 = vmul.f32 %v1431, %v1477
        %v1500 = vmul.f32 %v1432, %v1487
        %v1501 = vmul.f32 %v1433, %v1497
        %v1502 = vpack.c.bf16 %v1499, %v1498
        %v1503 = vpack.c.bf16 %v1501, %v1500
        %v1504 = vld [vmem:[#allocation7] sm:$0xf]
        %v1505 = vld [vmem:[#allocation7 + $0x4] sm:$0xf]
        %v1506 = vld [vmem:[#allocation7 + $0x8] sm:$0xf]
        %v1507 = vld [vmem:[#allocation7 + $0xc] sm:$0xf]
        %v1508 = vld [vmem:[%s4] sm:$0x1]
        %v1510 = vperm.slane %v1508, 0
        %v1516 = vunpack.c.l.b16 %v1504
        %v1517 = vunpack.c.l.b16 %v1505
        %v1518 = vunpack.c.l.b16 %v1506
        %v1519 = vunpack.c.l.b16 %v1507
        %v1520 = vpack.c.b16 %v1517, %v1516
        %v1521 = vpack.c.b16 %v1519, %v1518
        %v1525 = vsel %vm287, %v1502, 0
        %v1528 = vsel %vm287, %v1503, 0
        %1530 = vmatpush.bf16.msra.mxu0 0
        %1531 = vmatpush.bf16.msra.mxu0 0
        %1532 = vmatpush.bf16.msra.mxu0 0
        %1533 = vmatpush.bf16.msra.mxu0 0
        %1534 = vmatpush.bf16.msra.mxu0 0
        %1535 = vmatpush.bf16.msra.mxu0 0
        %1536 = vmatpush.bf16.msra.mxu0 %v1521
        %1537 = vmatpush.bf16.msra.mxu0 %v1520
        %1538 = vmatmul.bf16.gmra.mxu0 %v1525
        %v1539 = vpop.f32.mrf.mxu0
        %v1540 = vadd.f32 %v1510, %v1539
        %v1541 = vpop.f32.mrf.mxu0
        %v1542 = vadd.f32 %v1510, %v1541
        %1543 = vmatmul.bf16.gmra.mxu0 %v1528
        %v1544 = vpop.f32.mrf.mxu0
        %v1545 = vadd.f32 %v1510, %v1544
        %v1546 = vpop.f32.mrf.mxu0
        %v1547 = vadd.f32 %v1510, %v1546
        %1548 = vdwg.mxu0
        %v1549 = vmax.f32 %v1540, 0.0
        %v1550 = vmax.f32 %v1542, 0.0
        %v1551 = vmax.f32 %v1545, 0.0
        %v1552 = vmax.f32 %v1547, 0.0
        %v1553 = vadd.f32 %v1410, %v1549
        %v1554 = vadd.f32 %v1411, %v1550
        %v1555 = vadd.f32 %v1412, %v1551
        %v1556 = vadd.f32 %v1413, %v1552
        %1557 = vst.msk [vmem:[%s277] sm:$0xff] %vm287, %v1553
        %1558 = vst.msk [vmem:[%s277 + $0x8] sm:$0xff] %vm287, %v1554
        %1559 = vst.msk [vmem:[%s277 + $0x10] sm:$0xff] %vm287, %v1555
        %1560 = vst.msk [vmem:[%s277 + $0x18] sm:$0xff] %vm287, %v1556
        %s1561 = sand.u32 %s141, 1
        %s1562 = scalar_lea.sflag [#allocation4], %s1561
        %s1563 = sand.u32 %s141, 1
        %s1564 = smul.addr %s1563, 32
        %s1565 = scalar_lea.vmem [#allocation8], %s1564
        // Predicated region
        $region53: #{tpu_custom_call.1} parent=39 // pred_check
          %p1566 = pneg %p151
        $region54: #{tpu_custom_call.1} parent=39 // pred_check_branch
          %1568 = sbr.rel (%p1566) target = $region56
        $region55: #{tpu_custom_call.1} parent=39 // pred_region
          %s1569 = smul.u32 4, %s23
          %1571 = vsyncadd %s1562, 0
          %s1572 = smul.addr %s1569, 8
          %s1573 = scalar_lea.hbm %s5, %s1572
          %s1574 = sshll.u32 %s1565, 4
          %s1575 = int_to_ptr.vmem [resolvable:$true] %s1574
          %s1576 = sshll.u32 %s1573, 4
          %s1577 = int_to_ptr.hbm [resolvable:$true] %s1576
          %1582 = dma.vmem_to_hbm [thread:$0]  %s1575, 512, %s1577, %s1562, 128, 128, 8
        $region56: #{tpu_custom_call.1} parent=39 // pred_fallthru
          _
      $region40: #{tpu_custom_call.1} parent=5 // pred_fallthru
        _
      %p1583 = scmp.le.s32.totalorder 2, %s18
      // Predicated region
      $region57: #{tpu_custom_call.1} parent=5 // pred_check
        %p1584 = pneg %p1583
      $region58: #{tpu_custom_call.1} parent=5 // pred_check_branch
        %1586 = sbr.rel (%p1584) target = $region60
      $region59: #{tpu_custom_call.1} parent=5 // pred_region
        %s1587 = ssub.s32 %s18, 2
        // Predicated region
        $region61: #{tpu_custom_call.1} parent=59 // pred_check
          %p1588 = pneg %p157
        $region62: #{tpu_custom_call.1} parent=59 // pred_check_branch
          %1590 = sbr.rel (%p1588) target = $region64
        $region63: #{tpu_custom_call.1} parent=59 // pred_region
          %s1591 = sand.u32 %s142, 1
          %s1592 = scalar_lea.sflag [#allocation4], %s1591
          %s1593 = sand.u32 %s142, 1
          %s1594 = smul.addr %s1593, 32
          %s1595 = scalar_lea.vmem [#allocation8], %s1594
          %1597 = dma.done %s1592, 512
        $region64: #{tpu_custom_call.1} parent=59 // pred_fallthru
          _
      $region60: #{tpu_custom_call.1} parent=5 // pred_fallthru
        _
    $region6: #{tpu_custom_call.1} parent=1 // loop_footer
      %s22 = sadd.s32 1, %s18
    $region7: #{tpu_custom_call.1} parent=1 // loop_footer_branch
      %17 = sbr.rel target = $region3
    $region8: #{tpu_custom_call.1} parent=1 // loop_exit
      _
    %1598 = vsyncpa [#allocation3], 1
    %s1599 = scalar_lea.sflag [#allocation3], 1
    %1600 = vsyncpa %s1599, 1
    %1601 = vsyncpa [#allocation6], 1
    %1602 = vsyncpa [#allocation4], 1
    %s1603 = scalar_lea.sflag [#allocation4], 1
    %1604 = vsyncpa %s1603, 1

</llo_original>
